<compile_context>
chip_gen: v6e
topology: v6e:2x2x1
jax: 0.10.0
libtpu: 0.0.40
codegen_flags: <defaults>
</compile_context>

<pallas_src>
import functools

import jax
import jax.numpy as jnp
from jax import lax
from jax.experimental import pallas as pl
from jax.experimental.pallas import tpu as pltpu


def _round_up(v, m):
    return ((v + m - 1) // m) * m


# --------------------------------------------------------------------------
# Kernel 1: fused QKV projection + CAM attention matrix
# --------------------------------------------------------------------------
def _proj_cam_kernel(x_ref, w_ref, b_ref,              # inputs
                     q_ref, k_ref, v_ref, attc_ref,    # outputs
                     energy_scr,                       # scratch (C, C) f32
                     *, c, cqp):
    kk = pl.program_id(1)
    nkk = pl.num_programs(1)

    x16 = x_ref[...]                                    # (C, T) bf16

    # Fused V/Q/K projection: one (C + 2*Cqp, C) @ (C, T) bf16 MXU matmul.
    proj = jnp.dot(w_ref[...], x16,
                   preferred_element_type=jnp.float32) + b_ref[...]
    v_ref[...] = proj[:c].astype(v_ref.dtype)
    q_ref[...] = proj[c:c + cqp].astype(q_ref.dtype)
    k_ref[...] = proj[c + cqp:].astype(k_ref.dtype)

    # Channel-attention gram matrix: bf16 operands, f32 accumulation across
    # spatial tiles.  Padded (zero) columns of x contribute nothing.
    @pl.when(kk == 0)
    def _():
        energy_scr[...] = jnp.zeros_like(energy_scr)

    energy_scr[...] += lax.dot_general(
        x16, x16, (((1,), (1,)), ((), ())), preferred_element_type=jnp.float32)

    @pl.when(kk == nkk - 1)
    def _():
        en = energy_scr[...]
        # softmax(rowmax(en) - en)  ==  exp(rowmin(en) - en) / sum(...)
        e = jnp.exp(jnp.min(en, axis=-1, keepdims=True) - en)
        inv = pl.reciprocal(jnp.sum(e, axis=-1, keepdims=True), approx=True)
        attc_ref[...] = (e * inv).astype(attc_ref.dtype)


# --------------------------------------------------------------------------
# Kernel 2: flash-style spatial attention fused with the CAM apply + residuals
#           (K / V resident in VMEM for the whole batch element)
# --------------------------------------------------------------------------
def _danet_flash_kernel(gamma_ref,                               # SMEM (2,)
                        attc_ref, x_ref, q_ref, k_ref, v_ref,    # inputs
                        y_ref,                                   # output (C, T)
                        m_scr, l_scr, acc_scr,                   # scratch
                        *, tk, n_valid, n_pad):
    kk = pl.program_id(2)
    nkk = pl.num_programs(2)

    @pl.when(kk == 0)
    def _():
        m_scr[...] = jnp.full_like(m_scr, -jnp.inf)
        l_scr[...] = jnp.zeros_like(l_scr)
        acc_scr[...] = jnp.zeros_like(acc_scr)

    qb = q_ref[...]                                     # (CQP, TQ) bf16
    # K / V are resident (full N_pad); slice the current key window in-kernel
    # instead of re-streaming it from HBM for every query tile.
    off = pl.multiple_of(kk * tk, tk)
    kb = k_ref[:, pl.ds(off, tk)]                       # (CQP, TK) bf16
    vb = v_ref[:, pl.ds(off, tk)]                       # (C,   TK) bf16

    # s[n, m] = <k[:, n], q[:, m]>  -> (TK, TQ); softmax (key) axis is axis 0.
    s = lax.dot_general(kb, qb, (((0,), (0,)), ((), ())),
                        preferred_element_type=jnp.float32)
    if n_valid != n_pad:                                # static: mask padded keys
        key_idx = off + lax.broadcasted_iota(jnp.int32, s.shape, 0)
        s = jnp.where(key_idx < n_valid, s, -jnp.inf)

    m_blk = jnp.max(s, axis=0, keepdims=True)           # (1, TQ)
    m_new = jnp.maximum(m_scr[...], m_blk)
    alpha = jnp.exp(m_scr[...] - m_new)                 # (1, TQ)
    p = jnp.exp(s - m_new)                              # (TK, TQ)
    l_scr[...] = alpha * l_scr[...] + jnp.sum(p, axis=0, keepdims=True)
    # out_sa tile: v @ p -> (C, TQ), bf16 operands, f32 accumulate, no transpose.
    pv = lax.dot_general(vb, p.astype(jnp.bfloat16), (((1,), (0,)), ((), ())),
                         preferred_element_type=jnp.float32)
    acc_scr[...] = alpha * acc_scr[...] + pv
    m_scr[...] = m_new

    @pl.when(kk == nkk - 1)
    def _():
        gamma_ca = gamma_ref[0]
        gamma_sa = gamma_ref[1]
        x_q = x_ref[...]                                 # (C, TQ) bf16
        out_sa = acc_scr[...] * pl.reciprocal(l_scr[...], approx=True)
        # CAM apply: single-pass bf16 MXU matmul, f32 accumulation.
        out_ca = jnp.dot(attc_ref[...], x_q, preferred_element_type=jnp.float32)
        y = (2.0 * x_q.astype(jnp.float32)
             + gamma_ca * out_ca + gamma_sa * out_sa)
        y_ref[...] = y.astype(y_ref.dtype)


@jax.jit
def danet_forward(x, wq, wk, wv, bq, bk, bv, gamma_ca, gamma_sa):
    B, C, H, W = x.shape
    N = H * W
    Cq = wq.shape[0]
    assert C % 8 == 0, "channel dim must be a multiple of 8 sublanes"
    Cqp = _round_up(Cq, 8)                 # pad Q/K rows to a sublane multiple

    # Spatial tile: 256 keeps the MXU well fed on v6e/v7x and quarters the
    # grid-step count vs 128.  N is padded to a tile multiple and the tail
    # keys are masked (no full-N fallback).
    T = 128 if N <= 128 else 256
    N_pad = _round_up(N, T)
    nt = N_pad // T

    x_flat = x.reshape(B, C, N)
    if N_pad != N:
        x_flat = jnp.pad(x_flat, ((0, 0), (0, 0), (0, N_pad - N)))
    x_flat = x_flat.astype(jnp.bfloat16)   # halves the dominant x HBM stream

    def pad_rows(a, rows):
        if a.shape[0] == rows:
            return a
        pad = jnp.zeros((rows - a.shape[0],) + a.shape[1:], a.dtype)
        return jnp.concatenate([a, pad], axis=0)

    wq_p = pad_rows(wq, Cqp)
    wk_p = pad_rows(wk, Cqp)
    bq_p = pad_rows(bq.reshape(Cq, 1), Cqp)
    bk_p = pad_rows(bk.reshape(Cq, 1), Cqp)
    # Fused projection weight, sublane-aligned row groups: [V | Q_pad | K_pad].
    w_all = jnp.concatenate([wv, wq_p, wk_p], axis=0).astype(jnp.bfloat16)
    b_all = jnp.concatenate([bv.reshape(C, 1), bq_p, bk_p],
                            axis=0).astype(jnp.float32)

    # 48 MiB leaves headroom on v7x (64 MiB physical VMEM); raise on v5e/v6e
    # if resident K/V for very large N needs it, or shrink tiles instead.
    VMEM_LIMIT = 48 * 1024 * 1024

    # TODO(synk): for B == 1 on v7x, split kernel 1's spatial axis across the
    # two TensorCores with per-core partial gram scratch (megacore).
    q_arr, k_arr, v_arr, att_c = pl.pallas_call(
        functools.partial(_proj_cam_kernel, c=C, cqp=Cqp),
        grid=(B, nt),
        in_specs=[
            pl.BlockSpec((None, C, T), lambda b, kk: (b, 0, kk)),        # x
            pl.BlockSpec((C + 2 * Cqp, C), lambda b, kk: (0, 0)),        # w_all
            pl.BlockSpec((C + 2 * Cqp, 1), lambda b, kk: (0, 0)),        # b_all
        ],
        out_specs=[
            pl.BlockSpec((None, Cqp, T), lambda b, kk: (b, 0, kk)),      # q
            pl.BlockSpec((None, Cqp, T), lambda b, kk: (b, 0, kk)),      # k
            pl.BlockSpec((None, C, T), lambda b, kk: (b, 0, kk)),        # v
            pl.BlockSpec((None, C, C), lambda b, kk: (b, 0, 0)),         # att_c
        ],
        out_shape=(
            jax.ShapeDtypeStruct((B, Cqp, N_pad), jnp.bfloat16),
            jax.ShapeDtypeStruct((B, Cqp, N_pad), jnp.bfloat16),
            jax.ShapeDtypeStruct((B, C, N_pad), jnp.bfloat16),
            jax.ShapeDtypeStruct((B, C, C), jnp.bfloat16),
        ),
        scratch_shapes=[pltpu.VMEM((C, C), jnp.float32)],
        compiler_params=pltpu.CompilerParams(
            dimension_semantics=("parallel", "arbitrary"),
            vmem_limit_bytes=VMEM_LIMIT),
    )(x_flat, w_all, b_all)

    gammas = jnp.stack([gamma_ca, gamma_sa]).astype(jnp.float32)

    y = pl.pallas_call(
        functools.partial(_danet_flash_kernel, tk=T, n_valid=N, n_pad=N_pad),
        grid=(B, nt, nt),
        in_specs=[
            pl.BlockSpec(memory_space=pltpu.MemorySpace.SMEM),              # gammas
            pl.BlockSpec((None, C, C), lambda b, qi, kk: (b, 0, 0)),        # att_c
            pl.BlockSpec((None, C, T), lambda b, qi, kk: (b, 0, qi)),       # x (q tile)
            pl.BlockSpec((None, Cqp, T), lambda b, qi, kk: (b, 0, qi)),     # q
            pl.BlockSpec((None, Cqp, N_pad), lambda b, qi, kk: (b, 0, 0)),  # k (resident)
            pl.BlockSpec((None, C, N_pad), lambda b, qi, kk: (b, 0, 0)),    # v (resident)
        ],
        out_specs=pl.BlockSpec((None, C, T), lambda b, qi, kk: (b, 0, qi)),
        out_shape=jax.ShapeDtypeStruct((B, C, N_pad), x.dtype),
        scratch_shapes=[
            pltpu.VMEM((1, T), jnp.float32),   # running max
            pltpu.VMEM((1, T), jnp.float32),   # running denominator
            pltpu.VMEM((C, T), jnp.float32),   # out_sa accumulator
        ],
        compiler_params=pltpu.CompilerParams(
            dimension_semantics=("parallel", "parallel", "arbitrary"),
            vmem_limit_bytes=VMEM_LIMIT),
    )(gammas, att_c, x_flat, q_arr, k_arr, v_arr)

    return y[:, :, :N].reshape(B, C, H, W)


# --------------------------------------------------------------------------
# References
# --------------------------------------------------------------------------
def danet_ref_f32(x, wq, wk, wv, bq, bk, bv, g_ca, g_sa):
    """Pure-f32 JAX reference mirroring the PyTorch forward exactly."""
    HI = lax.Precision.HIGHEST
    B, C, H, W = x.shape
    N = H * W
    xf = x.reshape(B, C, N).astype(jnp.float32)

    energy = jnp.einsum('bcn,bdn->bcd', xf, xf, precision=HI)
    energy = jnp.max(energy, axis=-1, keepdims=True) - energy
    att = jax.nn.softmax(energy, axis=-1)
    out_ca = jnp.einsum('bcd,bdn->bcn', att, xf, precision=HI)
    x1 = g_ca * out_ca + xf

    q = jnp.einsum('oc,bcn->bon', wq, xf, precision=HI) + bq[None, :, None]
    k = jnp.einsum('oc,bcn->bon', wk, xf, precision=HI) + bk[None, :, None]
    v = jnp.einsum('oc,bcn->bon', wv, xf, precision=HI) + bv[None, :, None]
    es = jnp.einsum('bom,bon->bmn', q, k, precision=HI)
    atts = jax.nn.softmax(es, axis=-1)
    out_sa = jnp.einsum('bcn,bmn->bcm', v, atts, precision=HI)
    x2 = g_sa * out_sa + xf

    return (x1 + x2).reshape(B, C, H, W)


def danet_ref_mixed(x, wq, wk, wv, bq, bk, bv, g_ca, g_sa):
    """Reference mirroring the kernel's mixed precision (bf16 x / att_c /
    MXU operands, f32 accumulation)."""
    HI = lax.Precision.HIGHEST
    bf = jnp.bfloat16
    B, C, H, W = x.shape
    N = H * W
    xf = x.reshape(B, C, N).astype(jnp.float32)
    x16 = xf.astype(bf).astype(jnp.float32)            # kernel rounds x to bf16

    # CAM branch: bf16 gram operands / f32 accumulation, single-reduction
    # normalization, bf16 attention matrix, bf16 CAM-apply operands.
    energy = jnp.einsum('bcn,bdn->bcd', x16, x16, precision=HI)
    e = jnp.exp(jnp.min(energy, axis=-1, keepdims=True) - energy)
    att = (e / jnp.sum(e, axis=-1, keepdims=True)).astype(bf).astype(jnp.float32)
    out_ca = jnp.einsum('bcd,bdn->bcn', att, x16, precision=HI)

    # Spatial branch: bf16 MXU operands / f32 accumulation.
    def proj(w, b):
        p = jnp.einsum('oc,bcn->bon', w.astype(bf).astype(jnp.float32), x16,
                       precision=HI) + b[None, :, None]
        return p.astype(bf).astype(jnp.float32)

    q = proj(wq, bq)
    k = proj(wk, bk)
    v = proj(wv, bv)
    es = jnp.einsum('bom,bon->bmn', q, k, precision=HI)
    atts = jax.nn.softmax(es, axis=-1).astype(bf).astype(jnp.float32)
    out_sa = jnp.einsum('bcn,bmn->bcm', v, atts, precision=HI)

    y = 2.0 * x16 + g_ca * out_ca + g_sa * out_sa
    return y.reshape(B, C, H, W)


if __name__ == "__main__":
    # Two cases: N a tile multiple (16x16) and N needing pad+mask (20x20).
    for (B, C, H, W) in [(2, 8, 16, 16), (2, 8, 20, 20)]:
        Cq = C // 4                       # in_dim // 4 as in DANet.__init__

        key = jax.random.PRNGKey(0)
        kx, kwq, kwk, kwv, kbq, kbk, kbv = jax.random.split(key, 7)

        x = jax.random.normal(kx, (B, C, H, W), dtype=jnp.float32)

        # Deterministic parameter init (shapes from the module's __init__).
        # PyTorch inits gamma to 0; nonzero values so both branches contribute.
        wq = jax.random.normal(kwq, (Cq, C), dtype=jnp.float32) * 0.1
        wk = jax.random.normal(kwk, (Cq, C), dtype=jnp.float32) * 0.1
        wv = jax.random.normal(kwv, (C, C), dtype=jnp.float32) * 0.1
        bq = jax.random.normal(kbq, (Cq,), dtype=jnp.float32) * 0.1
        bk = jax.random.normal(kbk, (Cq,), dtype=jnp.float32) * 0.1
        bv = jax.random.normal(kbv, (C,), dtype=jnp.float32) * 0.1
        gamma_ca = jnp.float32(0.5)
        gamma_sa = jnp.float32(0.7)

        y = danet_forward(x, wq, wk, wv, bq, bk, bv, gamma_ca, gamma_sa)
        y = jax.block_until_ready(y)
        assert y.shape == (B, C, H, W)

        y_mixed = danet_ref_mixed(x, wq, wk, wv, bq, bk, bv, gamma_ca, gamma_sa)
        y_f32 = danet_ref_f32(x, wq, wk, wv, bq, bk, bv, gamma_ca, gamma_sa)

        err_mixed = float(jnp.max(jnp.abs(y - y_mixed)))
        assert err_mixed < 3e-2, f"mismatch vs mixed-precision reference: {err_mixed}"
        rel_f32 = float(jnp.linalg.norm((y - y_f32).ravel())
                        / (jnp.linalg.norm(y_f32.ravel()) + 1e-6))
        assert rel_f32 < 5e-2, f"mismatch vs f32 reference: rel={rel_f32}"

    print("KERNEL_OK")
</pallas_src>

<mosaic_0001>
module attributes {stable_mosaic.version = 11 : i64} {
  func.func @_proj_cam_kernel(%arg0: i32, %arg1: i32, %arg2: memref<1x8x256xbf16, #tpu.memory_space<vmem>>, %arg3: memref<24x8xbf16, #tpu.memory_space<vmem>>, %arg4: memref<24x1xf32, #tpu.memory_space<vmem>>, %arg5: memref<1x8x256xbf16, #tpu.memory_space<vmem>>, %arg6: memref<1x8x256xbf16, #tpu.memory_space<vmem>>, %arg7: memref<1x8x256xbf16, #tpu.memory_space<vmem>>, %arg8: memref<1x8x8xbf16, #tpu.memory_space<vmem>>, %arg9: memref<8x8xf32, #tpu.memory_space<vmem>>) attributes {dimension_semantics = [#tpu.dimension_semantics<parallel>, #tpu.dimension_semantics<arbitrary>], iteration_bounds = array<i64: 2, 1>, scalar_prefetch = 0 : i64, scratch_operands = 1 : i64, tpu.core_type = #tpu.core_type<tc>, window_params = [{transform_indices = @transform_0, window_bounds = array<i64: 1, 8, 256>}, {pipeline_mode = #tpu.pipeline_mode<synchronous>, transform_indices = @transform_1, window_bounds = array<i64: 24, 8>}, {pipeline_mode = #tpu.pipeline_mode<synchronous>, transform_indices = @transform_2, window_bounds = array<i64: 24, 1>}, {transform_indices = @transform_3, window_bounds = array<i64: 1, 8, 256>}, {transform_indices = @transform_4, window_bounds = array<i64: 1, 8, 256>}, {transform_indices = @transform_5, window_bounds = array<i64: 1, 8, 256>}, {transform_indices = @transform_6, window_bounds = array<i64: 1, 8, 8>}]} {
    %c0 = arith.constant 0 : index
    %c0_0 = arith.constant 0 : index
    %c0_1 = arith.constant 0 : index
    %0 = vector.load %arg2[%c0, %c0_0, %c0_1] : memref<1x8x256xbf16, #tpu.memory_space<vmem>>, vector<1x8x256xbf16>
    %1 = vector.shape_cast %0 : vector<1x8x256xbf16> to vector<8x256xbf16>
    %c0_2 = arith.constant 0 : index
    %c0_3 = arith.constant 0 : index
    %2 = vector.load %arg3[%c0_2, %c0_3] : memref<24x8xbf16, #tpu.memory_space<vmem>>, vector<24x8xbf16>
    %cst = arith.constant dense<0.000000e+00> : vector<24x256xf32>
    %3 = tpu.matmul %2, %1, %cst {dimension_numbers = #tpu.dot_dimension_numbers<[1], [0], [0], [1], [0, 0, 1, 1], [], []>} : vector<24x8xbf16>, vector<8x256xbf16>, vector<24x256xf32> -> vector<24x256xf32>
    %c0_4 = arith.constant 0 : index
    %c0_5 = arith.constant 0 : index
    %4 = vector.load %arg4[%c0_4, %c0_5] : memref<24x1xf32, #tpu.memory_space<vmem>>, vector<24x1xf32>
    %5 = vector.broadcast %4 : vector<24x1xf32> to vector<24x256xf32>
    %6 = arith.addf %3, %5 : vector<24x256xf32>
    %7 = vector.extract_strided_slice %6 {offsets = [0, 0], sizes = [8, 256], strides = [1, 1]} : vector<24x256xf32> to vector<8x256xf32>
    %8 = arith.truncf %7 : vector<8x256xf32> to vector<8x256xbf16>
    %c0_6 = arith.constant 0 : index
    %c0_7 = arith.constant 0 : index
    %c0_8 = arith.constant 0 : index
    %9 = vector.load %arg7[%c0_6, %c0_7, %c0_8] : memref<1x8x256xbf16, #tpu.memory_space<vmem>>, vector<1x8x256xbf16>
    %10 = vector.shape_cast %9 : vector<1x8x256xbf16> to vector<8x256xbf16>
    %11 = vector.shape_cast %8 : vector<8x256xbf16> to vector<1x8x256xbf16>
    tpu.vector_store %arg7[%c0_6, %c0_7, %c0_8], %11 {strides = array<i32>} : memref<1x8x256xbf16, #tpu.memory_space<vmem>>, vector<1x8x256xbf16>,
    %12 = vector.extract_strided_slice %6 {offsets = [8, 0], sizes = [8, 256], strides = [1, 1]} : vector<24x256xf32> to vector<8x256xf32>
    %13 = arith.truncf %12 : vector<8x256xf32> to vector<8x256xbf16>
    %c0_9 = arith.constant 0 : index
    %c0_10 = arith.constant 0 : index
    %c0_11 = arith.constant 0 : index
    %14 = vector.load %arg5[%c0_9, %c0_10, %c0_11] : memref<1x8x256xbf16, #tpu.memory_space<vmem>>, vector<1x8x256xbf16>
    %15 = vector.shape_cast %14 : vector<1x8x256xbf16> to vector<8x256xbf16>
    %16 = vector.shape_cast %13 : vector<8x256xbf16> to vector<1x8x256xbf16>
    tpu.vector_store %arg5[%c0_9, %c0_10, %c0_11], %16 {strides = array<i32>} : memref<1x8x256xbf16, #tpu.memory_space<vmem>>, vector<1x8x256xbf16>,
    %17 = vector.extract_strided_slice %6 {offsets = [16, 0], sizes = [8, 256], strides = [1, 1]} : vector<24x256xf32> to vector<8x256xf32>
    %18 = arith.truncf %17 : vector<8x256xf32> to vector<8x256xbf16>
    %c0_12 = arith.constant 0 : index
    %c0_13 = arith.constant 0 : index
    %c0_14 = arith.constant 0 : index
    %19 = vector.load %arg6[%c0_12, %c0_13, %c0_14] : memref<1x8x256xbf16, #tpu.memory_space<vmem>>, vector<1x8x256xbf16>
    %20 = vector.shape_cast %19 : vector<1x8x256xbf16> to vector<8x256xbf16>
    %21 = vector.shape_cast %18 : vector<8x256xbf16> to vector<1x8x256xbf16>
    tpu.vector_store %arg6[%c0_12, %c0_13, %c0_14], %21 {strides = array<i32>} : memref<1x8x256xbf16, #tpu.memory_space<vmem>>, vector<1x8x256xbf16>,
    %c0_i32 = arith.constant 0 : i32
    %22 = arith.cmpi eq, %arg1, %c0_i32 : i32
    %23 = arith.extui %22 : i1 to i32
    %c0_i32_15 = arith.constant 0 : i32
    %24 = arith.cmpi ne, %23, %c0_i32_15 : i32
    scf.if %24 {
      %cst_23 = arith.constant 0.000000e+00 : f32
      %32 = vector.broadcast %cst_23 : f32 to vector<8x8xf32>
      %c0_24 = arith.constant 0 : index
      %c0_25 = arith.constant 0 : index
      %33 = vector.load %arg9[%c0_24, %c0_25] : memref<8x8xf32, #tpu.memory_space<vmem>>, vector<8x8xf32>
      tpu.vector_store %arg9[%c0_24, %c0_25], %32 {strides = array<i32>} : memref<8x8xf32, #tpu.memory_space<vmem>>, vector<8x8xf32>,
    } else {
    }
    %c0_16 = arith.constant 0 : index
    %c0_17 = arith.constant 0 : index
    %25 = vector.load %arg9[%c0_16, %c0_17] : memref<8x8xf32, #tpu.memory_space<vmem>>, vector<8x8xf32>
    %cst_18 = arith.constant dense<0.000000e+00> : vector<8x8xf32>
    %26 = tpu.matmul %1, %1, %cst_18 {dimension_numbers = #tpu.dot_dimension_numbers<[1], [1], [0], [0], [0, 0, 1, 0], [], []>} : vector<8x256xbf16>, vector<8x256xbf16>, vector<8x8xf32> -> vector<8x8xf32>
    %27 = arith.addf %25, %26 : vector<8x8xf32>
    %c0_19 = arith.constant 0 : index
    %c0_20 = arith.constant 0 : index
    %28 = vector.load %arg9[%c0_19, %c0_20] : memref<8x8xf32, #tpu.memory_space<vmem>>, vector<8x8xf32>
    tpu.vector_store %arg9[%c0_19, %c0_20], %27 {strides = array<i32>} : memref<8x8xf32, #tpu.memory_space<vmem>>, vector<8x8xf32>,
    %c0_i32_21 = arith.constant 0 : i32
    %29 = arith.cmpi eq, %arg1, %c0_i32_21 : i32
    %30 = arith.extui %29 : i1 to i32
    %c0_i32_22 = arith.constant 0 : i32
    %31 = arith.cmpi ne, %30, %c0_i32_22 : i32
    scf.if %31 {
      %c0_23 = arith.constant 0 : index
      %c0_24 = arith.constant 0 : index
      %32 = vector.load %arg9[%c0_23, %c0_24] : memref<8x8xf32, #tpu.memory_space<vmem>>, vector<8x8xf32>
      %cst_25 = arith.constant dense<0x7F800000> : vector<8xf32>
      %33 = vector.multi_reduction <minimumf>, %32, %cst_25 [1] : vector<8x8xf32> to vector<8xf32>
      %34 = vector.shape_cast %33 : vector<8xf32> to vector<8x1xf32>
      %35 = vector.broadcast %34 : vector<8x1xf32> to vector<8x8xf32>
      %36 = arith.subf %35, %32 : vector<8x8xf32>
      %37 = math.exp %36 : vector<8x8xf32>
      %cst_26 = arith.constant dense<0.000000e+00> : vector<8xf32>
      %38 = vector.multi_reduction <add>, %37, %cst_26 [1] : vector<8x8xf32> to vector<8xf32>
      %39 = vector.shape_cast %38 : vector<8xf32> to vector<8x1xf32>
      %40 = tpu.reciprocal %39 {approx = true} : vector<8x1xf32> -> vector<8x1xf32>
      %41 = vector.broadcast %40 : vector<8x1xf32> to vector<8x8xf32>
      %42 = arith.mulf %37, %41 : vector<8x8xf32>
      %43 = arith.truncf %42 : vector<8x8xf32> to vector<8x8xbf16>
      %c0_27 = arith.constant 0 : index
      %c0_28 = arith.constant 0 : index
      %c0_29 = arith.constant 0 : index
      %44 = vector.load %arg8[%c0_27, %c0_28, %c0_29] : memref<1x8x8xbf16, #tpu.memory_space<vmem>>, vector<1x8x8xbf16>
      %45 = vector.shape_cast %44 : vector<1x8x8xbf16> to vector<8x8xbf16>
      %46 = vector.shape_cast %43 : vector<8x8xbf16> to vector<1x8x8xbf16>
      tpu.vector_store %arg8[%c0_27, %c0_28, %c0_29], %46 {strides = array<i32>} : memref<1x8x8xbf16, #tpu.memory_space<vmem>>, vector<1x8x8xbf16>,
    } else {
    }
    return
  }
  func.func @transform_0(%arg0: i32, %arg1: i32) -> (i32, i32, i32) {
    %c0_i32 = arith.constant 0 : i32
    %c0_i32_0 = arith.constant 0 : i32
    return %arg0, %c0_i32, %arg1 : i32, i32, i32
  }
  func.func @transform_1(%arg0: i32, %arg1: i32) -> (i32, i32) {
    %c0_i32 = arith.constant 0 : i32
    %c0_i32_0 = arith.constant 0 : i32
    %c0_i32_1 = arith.constant 0 : i32
    return %c0_i32, %c0_i32_0 : i32, i32
  }
  func.func @transform_2(%arg0: i32, %arg1: i32) -> (i32, i32) {
    %c0_i32 = arith.constant 0 : i32
    %c0_i32_0 = arith.constant 0 : i32
    %c0_i32_1 = arith.constant 0 : i32
    return %c0_i32, %c0_i32_0 : i32, i32
  }
  func.func @transform_3(%arg0: i32, %arg1: i32) -> (i32, i32, i32) {
    %c0_i32 = arith.constant 0 : i32
    %c0_i32_0 = arith.constant 0 : i32
    return %arg0, %c0_i32, %arg1 : i32, i32, i32
  }
  func.func @transform_4(%arg0: i32, %arg1: i32) -> (i32, i32, i32) {
    %c0_i32 = arith.constant 0 : i32
    %c0_i32_0 = arith.constant 0 : i32
    return %arg0, %c0_i32, %arg1 : i32, i32, i32
  }
  func.func @transform_5(%arg0: i32, %arg1: i32) -> (i32, i32, i32) {
    %c0_i32 = arith.constant 0 : i32
    %c0_i32_0 = arith.constant 0 : i32
    return %arg0, %c0_i32, %arg1 : i32, i32, i32
  }
  func.func @transform_6(%arg0: i32, %arg1: i32) -> (i32, i32, i32) {
    %c0_i32 = arith.constant 0 : i32
    %c0_i32_0 = arith.constant 0 : i32
    %c0_i32_1 = arith.constant 0 : i32
    return %arg0, %c0_i32, %c0_i32_0 : i32, i32, i32
  }
}

module attributes {stable_mosaic.version = 11 : i64} {
  func.func @_danet_flash_kernel(%arg0: i32, %arg1: i32, %arg2: i32, %arg3: memref<2xf32, #tpu.memory_space<smem>>, %arg4: memref<1x8x8xbf16, #tpu.memory_space<vmem>>, %arg5: memref<1x8x256xbf16, #tpu.memory_space<vmem>>, %arg6: memref<1x8x256xbf16, #tpu.memory_space<vmem>>, %arg7: memref<1x8x256xbf16, #tpu.memory_space<vmem>>, %arg8: memref<1x8x256xbf16, #tpu.memory_space<vmem>>, %arg9: memref<1x8x256xf32, #tpu.memory_space<vmem>>, %arg10: memref<1x256xf32, #tpu.memory_space<vmem>>, %arg11: memref<1x256xf32, #tpu.memory_space<vmem>>, %arg12: memref<8x256xf32, #tpu.memory_space<vmem>>) attributes {dimension_semantics = [#tpu.dimension_semantics<parallel>, #tpu.dimension_semantics<parallel>, #tpu.dimension_semantics<arbitrary>], iteration_bounds = array<i64: 2, 1, 1>, scalar_prefetch = 0 : i64, scratch_operands = 3 : i64, tpu.core_type = #tpu.core_type<tc>, window_params = [{transform_indices = @transform_0, window_bounds = array<i64: 2>}, {transform_indices = @transform_1, window_bounds = array<i64: 1, 8, 8>}, {transform_indices = @transform_2, window_bounds = array<i64: 1, 8, 256>}, {transform_indices = @transform_3, window_bounds = array<i64: 1, 8, 256>}, {transform_indices = @transform_4, window_bounds = array<i64: 1, 8, 256>}, {transform_indices = @transform_5, window_bounds = array<i64: 1, 8, 256>}, {transform_indices = @transform_6, window_bounds = array<i64: 1, 8, 256>}]} {
    %c0_i32 = arith.constant 0 : i32
    %0 = arith.cmpi eq, %arg2, %c0_i32 : i32
    %1 = arith.extui %0 : i1 to i32
    %c0_i32_0 = arith.constant 0 : i32
    %2 = arith.cmpi ne, %1, %c0_i32_0 : i32
    scf.if %2 {
      %cst_26 = arith.constant 0xFF800000 : f32
      %41 = vector.broadcast %cst_26 : f32 to vector<1x256xf32>
      %c0_27 = arith.constant 0 : index
      %c0_28 = arith.constant 0 : index
      %42 = vector.load %arg10[%c0_27, %c0_28] : memref<1x256xf32, #tpu.memory_space<vmem>>, vector<1x256xf32>
      tpu.vector_store %arg10[%c0_27, %c0_28], %41 {strides = array<i32>} : memref<1x256xf32, #tpu.memory_space<vmem>>, vector<1x256xf32>,
      %cst_29 = arith.constant 0.000000e+00 : f32
      %43 = vector.broadcast %cst_29 : f32 to vector<1x256xf32>
      %c0_30 = arith.constant 0 : index
      %c0_31 = arith.constant 0 : index
      %44 = vector.load %arg11[%c0_30, %c0_31] : memref<1x256xf32, #tpu.memory_space<vmem>>, vector<1x256xf32>
      tpu.vector_store %arg11[%c0_30, %c0_31], %43 {strides = array<i32>} : memref<1x256xf32, #tpu.memory_space<vmem>>, vector<1x256xf32>,
      %cst_32 = arith.constant 0.000000e+00 : f32
      %45 = vector.broadcast %cst_32 : f32 to vector<8x256xf32>
      %c0_33 = arith.constant 0 : index
      %c0_34 = arith.constant 0 : index
      %46 = vector.load %arg12[%c0_33, %c0_34] : memref<8x256xf32, #tpu.memory_space<vmem>>, vector<8x256xf32>
      tpu.vector_store %arg12[%c0_33, %c0_34], %45 {strides = array<i32>} : memref<8x256xf32, #tpu.memory_space<vmem>>, vector<8x256xf32>,
    } else {
    }
    %c0 = arith.constant 0 : index
    %c0_1 = arith.constant 0 : index
    %c0_2 = arith.constant 0 : index
    %3 = vector.load %arg6[%c0, %c0_1, %c0_2] : memref<1x8x256xbf16, #tpu.memory_space<vmem>>, vector<1x8x256xbf16>
    %4 = vector.shape_cast %3 : vector<1x8x256xbf16> to vector<8x256xbf16>
    %c256_i32 = arith.constant 256 : i32
    %5 = arith.muli %arg2, %c256_i32 : i32
    %6 = tpu.assume_multiple %5, 256 : i32
    %c0_3 = arith.constant 0 : index
    %c0_4 = arith.constant 0 : index
    %7 = arith.index_cast %6 : i32 to index
    %8 = vector.load %arg7[%c0_3, %c0_4, %7] : memref<1x8x256xbf16, #tpu.memory_space<vmem>>, vector<1x8x256xbf16>
    %9 = vector.shape_cast %8 : vector<1x8x256xbf16> to vector<8x256xbf16>
    %c0_5 = arith.constant 0 : index
    %c0_6 = arith.constant 0 : index
    %10 = arith.index_cast %6 : i32 to index
    %11 = vector.load %arg8[%c0_5, %c0_6, %10] : memref<1x8x256xbf16, #tpu.memory_space<vmem>>, vector<1x8x256xbf16>
    %12 = vector.shape_cast %11 : vector<1x8x256xbf16> to vector<8x256xbf16>
    %cst = arith.constant dense<0.000000e+00> : vector<256x256xf32>
    %13 = tpu.matmul %9, %4, %cst {dimension_numbers = #tpu.dot_dimension_numbers<[0], [0], [1], [1], [0, 1, 1, 1], [], []>} : vector<8x256xbf16>, vector<8x256xbf16>, vector<256x256xf32> -> vector<256x256xf32>
    %cst_7 = arith.constant dense<0xFF800000> : vector<256xf32>
    %14 = vector.multi_reduction <maximumf>, %13, %cst_7 [0] : vector<256x256xf32> to vector<256xf32>
    %15 = vector.shape_cast %14 : vector<256xf32> to vector<1x256xf32>
    %c0_8 = arith.constant 0 : index
    %c0_9 = arith.constant 0 : index
    %16 = vector.load %arg10[%c0_8, %c0_9] : memref<1x256xf32, #tpu.memory_space<vmem>>, vector<1x256xf32>
    %17 = arith.maximumf %16, %15 : vector<1x256xf32>
    %c0_10 = arith.constant 0 : index
    %c0_11 = arith.constant 0 : index
    %18 = vector.load %arg10[%c0_10, %c0_11] : memref<1x256xf32, #tpu.memory_space<vmem>>, vector<1x256xf32>
    %19 = arith.subf %18, %17 : vector<1x256xf32>
    %20 = math.exp %19 : vector<1x256xf32>
    %21 = vector.broadcast %17 : vector<1x256xf32> to vector<256x256xf32>
    %22 = arith.subf %13, %21 : vector<256x256xf32>
    %23 = math.exp %22 : vector<256x256xf32>
    %c0_12 = arith.constant 0 : index
    %c0_13 = arith.constant 0 : index
    %24 = vector.load %arg11[%c0_12, %c0_13] : memref<1x256xf32, #tpu.memory_space<vmem>>, vector<1x256xf32>
    %25 = arith.mulf %20, %24 : vector<1x256xf32>
    %cst_14 = arith.constant dense<0.000000e+00> : vector<256xf32>
    %26 = vector.multi_reduction <add>, %23, %cst_14 [0] : vector<256x256xf32> to vector<256xf32>
    %27 = vector.shape_cast %26 : vector<256xf32> to vector<1x256xf32>
    %28 = arith.addf %25, %27 : vector<1x256xf32>
    %c0_15 = arith.constant 0 : index
    %c0_16 = arith.constant 0 : index
    %29 = vector.load %arg11[%c0_15, %c0_16] : memref<1x256xf32, #tpu.memory_space<vmem>>, vector<1x256xf32>
    tpu.vector_store %arg11[%c0_15, %c0_16], %28 {strides = array<i32>} : memref<1x256xf32, #tpu.memory_space<vmem>>, vector<1x256xf32>,
    %30 = arith.truncf %23 : vector<256x256xf32> to vector<256x256xbf16>
    %cst_17 = arith.constant dense<0.000000e+00> : vector<8x256xf32>
    %31 = tpu.matmul %12, %30, %cst_17 {dimension_numbers = #tpu.dot_dimension_numbers<[1], [0], [0], [1], [0, 0, 1, 1], [], []>} : vector<8x256xbf16>, vector<256x256xbf16>, vector<8x256xf32> -> vector<8x256xf32>
    %c0_18 = arith.constant 0 : index
    %c0_19 = arith.constant 0 : index
    %32 = vector.load %arg12[%c0_18, %c0_19] : memref<8x256xf32, #tpu.memory_space<vmem>>, vector<8x256xf32>
    %33 = vector.broadcast %20 : vector<1x256xf32> to vector<8x256xf32>
    %34 = arith.mulf %33, %32 : vector<8x256xf32>
    %35 = arith.addf %34, %31 : vector<8x256xf32>
    %c0_20 = arith.constant 0 : index
    %c0_21 = arith.constant 0 : index
    %36 = vector.load %arg12[%c0_20, %c0_21] : memref<8x256xf32, #tpu.memory_space<vmem>>, vector<8x256xf32>
    tpu.vector_store %arg12[%c0_20, %c0_21], %35 {strides = array<i32>} : memref<8x256xf32, #tpu.memory_space<vmem>>, vector<8x256xf32>,
    %c0_22 = arith.constant 0 : index
    %c0_23 = arith.constant 0 : index
    %37 = vector.load %arg10[%c0_22, %c0_23] : memref<1x256xf32, #tpu.memory_space<vmem>>, vector<1x256xf32>
    tpu.vector_store %arg10[%c0_22, %c0_23], %17 {strides = array<i32>} : memref<1x256xf32, #tpu.memory_space<vmem>>, vector<1x256xf32>,
    %c0_i32_24 = arith.constant 0 : i32
    %38 = arith.cmpi eq, %arg2, %c0_i32_24 : i32
    %39 = arith.extui %38 : i1 to i32
    %c0_i32_25 = arith.constant 0 : i32
    %40 = arith.cmpi ne, %39, %c0_i32_25 : i32
    scf.if %40 {
      %c0_26 = arith.constant 0 : index
      %41 = memref.load %arg3[%c0_26] : memref<2xf32, #tpu.memory_space<smem>>
      %c1 = arith.constant 1 : index
      %42 = memref.load %arg3[%c1] : memref<2xf32, #tpu.memory_space<smem>>
      %c0_27 = arith.constant 0 : index
      %c0_28 = arith.constant 0 : index
      %c0_29 = arith.constant 0 : index
      %43 = vector.load %arg5[%c0_27, %c0_28, %c0_29] : memref<1x8x256xbf16, #tpu.memory_space<vmem>>, vector<1x8x256xbf16>
      %44 = vector.shape_cast %43 : vector<1x8x256xbf16> to vector<8x256xbf16>
      %c0_30 = arith.constant 0 : index
      %c0_31 = arith.constant 0 : index
      %45 = vector.load %arg12[%c0_30, %c0_31] : memref<8x256xf32, #tpu.memory_space<vmem>>, vector<8x256xf32>
      %c0_32 = arith.constant 0 : index
      %c0_33 = arith.constant 0 : index
      %46 = vector.load %arg11[%c0_32, %c0_33] : memref<1x256xf32, #tpu.memory_space<vmem>>, vector<1x256xf32>
      %47 = tpu.reciprocal %46 {approx = true} : vector<1x256xf32> -> vector<1x256xf32>
      %48 = vector.broadcast %47 : vector<1x256xf32> to vector<8x256xf32>
      %49 = arith.mulf %45, %48 : vector<8x256xf32>
      %c0_34 = arith.constant 0 : index
      %c0_35 = arith.constant 0 : index
      %c0_36 = arith.constant 0 : index
      %50 = vector.load %arg4[%c0_34, %c0_35, %c0_36] : memref<1x8x8xbf16, #tpu.memory_space<vmem>>, vector<1x8x8xbf16>
      %51 = vector.shape_cast %50 : vector<1x8x8xbf16> to vector<8x8xbf16>
      %cst_37 = arith.constant dense<0.000000e+00> : vector<8x256xf32>
      %52 = tpu.matmul %51, %44, %cst_37 {dimension_numbers = #tpu.dot_dimension_numbers<[1], [0], [0], [1], [0, 0, 1, 1], [], []>} : vector<8x8xbf16>, vector<8x256xbf16>, vector<8x256xf32> -> vector<8x256xf32>
      %53 = arith.extf %44 : vector<8x256xbf16> to vector<8x256xf32>
      %cst_38 = arith.constant 2.000000e+00 : f32
      %54 = vector.broadcast %cst_38 : f32 to vector<8x256xf32>
      %55 = arith.mulf %54, %53 : vector<8x256xf32>
      %56 = vector.broadcast %41 : f32 to vector<8x256xf32>
      %57 = arith.mulf %56, %52 : vector<8x256xf32>
      %58 = arith.addf %55, %57 : vector<8x256xf32>
      %59 = vector.broadcast %42 : f32 to vector<8x256xf32>
      %60 = arith.mulf %59, %49 : vector<8x256xf32>
      %61 = arith.addf %58, %60 : vector<8x256xf32>
      %c0_39 = arith.constant 0 : index
      %c0_40 = arith.constant 0 : index
      %c0_41 = arith.constant 0 : index
      %62 = vector.load %arg9[%c0_39, %c0_40, %c0_41] : memref<1x8x256xf32, #tpu.memory_space<vmem>>, vector<1x8x256xf32>
      %63 = vector.shape_cast %62 : vector<1x8x256xf32> to vector<8x256xf32>
      %64 = vector.shape_cast %61 : vector<8x256xf32> to vector<1x8x256xf32>
      tpu.vector_store %arg9[%c0_39, %c0_40, %c0_41], %64 {strides = array<i32>} : memref<1x8x256xf32, #tpu.memory_space<vmem>>, vector<1x8x256xf32>,
    } else {
    }
    return
  }
  func.func @transform_0(%arg0: i32, %arg1: i32, %arg2: i32) -> i32 {
    %c0_i32 = arith.constant 0 : i32
    %c0_i32_0 = arith.constant 0 : i32
    return %c0_i32 : i32
  }
  func.func @transform_1(%arg0: i32, %arg1: i32, %arg2: i32) -> (i32, i32, i32) {
    %c0_i32 = arith.constant 0 : i32
    %c0_i32_0 = arith.constant 0 : i32
    %c0_i32_1 = arith.constant 0 : i32
    return %arg0, %c0_i32, %c0_i32_0 : i32, i32, i32
  }
  func.func @transform_2(%arg0: i32, %arg1: i32, %arg2: i32) -> (i32, i32, i32) {
    %c0_i32 = arith.constant 0 : i32
    %c0_i32_0 = arith.constant 0 : i32
    return %arg0, %c0_i32, %arg1 : i32, i32, i32
  }
  func.func @transform_3(%arg0: i32, %arg1: i32, %arg2: i32) -> (i32, i32, i32) {
    %c0_i32 = arith.constant 0 : i32
    %c0_i32_0 = arith.constant 0 : i32
    return %arg0, %c0_i32, %arg1 : i32, i32, i32
  }
  func.func @transform_4(%arg0: i32, %arg1: i32, %arg2: i32) -> (i32, i32, i32) {
    %c0_i32 = arith.constant 0 : i32
    %c0_i32_0 = arith.constant 0 : i32
    %c0_i32_1 = arith.constant 0 : i32
    return %arg0, %c0_i32, %c0_i32_0 : i32, i32, i32
  }
  func.func @transform_5(%arg0: i32, %arg1: i32, %arg2: i32) -> (i32, i32, i32) {
    %c0_i32 = arith.constant 0 : i32
    %c0_i32_0 = arith.constant 0 : i32
    %c0_i32_1 = arith.constant 0 : i32
    return %arg0, %c0_i32, %c0_i32_0 : i32, i32, i32
  }
  func.func @transform_6(%arg0: i32, %arg1: i32, %arg2: i32) -> (i32, i32, i32) {
    %c0_i32 = arith.constant 0 : i32
    %c0_i32_0 = arith.constant 0 : i32
    return %arg0, %c0_i32, %arg1 : i32, i32, i32
  }
}

</mosaic_0001>

<llo_original>
// kernel: danet_forward.2
$region0: #{danet_forward.2}
  #allocation0 [shape = 'u32[]', space=smem, size = 0x4, offset = 0x4, fixed_abs, tag = 'smem constant byte address 0x4 - core index']
  #allocation1 [shape = 'u32[144,128]{1,0:T(1,128)}', space=vmem, size = 0x12000, scoped, tag = 'internal scratch']
  #allocation2 [shape = 'f32[8,8]{1,0:T(8,128)}', space=vmem, size = 0x1000, scoped, tag = 'scratch operand']
  %s0 = inlined_call_operand.vmem [shape: bf16[2,8,256], index: 0, kind: input, shape index: {}]
  %s1 = inlined_call_operand.vmem [shape: bf16[24,8], index: 1, kind: input, shape index: {}]
  %s2 = inlined_call_operand.vmem [shape: f32[24,1], index: 2, kind: input, shape index: {}]
  %s3 = inlined_call_operand.vmem [shape: bf16[2,8,256], index: 3, kind: output, shape index: {0}]
  %s4 = inlined_call_operand.vmem [shape: bf16[2,8,256], index: 4, kind: output, shape index: {1}]
  %s5 = inlined_call_operand.vmem [shape: bf16[2,8,256], index: 5, kind: output, shape index: {2}]
  %s6 = inlined_call_operand.vmem [shape: bf16[2,8,8], index: 6, kind: output, shape index: {3}]
  %7 = xla_tuple %s3, %s4, %s5, %s6
  %s8 = sld [smem:[#allocation0]]
  $region77: #{danet_forward.2} parent=0
    _
  %s10 = ssub.s32 1, %s8
  %s11 = scalar_select 0, %s10, %s8
  loop: start=0, step=1, limit=4
  $region2: #{danet_forward.2} parent=0 // loop_pre_header
    _
  $region3: #{danet_forward.2} parent=0 // loop_header
    %s13 = sphi 0, %s17
    %p14 = scmp.ge.s32.totalorder %s13, 4
    %s20 = sphi 0, %s32
    %s21 = sphi 0, %s28
    %s22 = sphi 0, %s20
    %s23 = sphi 0, %s21
    %s24 = sphi 0, %s22
    %s25 = sphi 0, %s23
    %s37 = sphi 0, %s39
    %s40 = sphi 0, %s37
    %s41 = sphi 0, %s40
    %s57 = sphi 0, %s41
    %s61 = sphi 0, %s61
    %s63 = sphi 0, %s61
    %s64 = sphi 0, %s63
    %s78 = sphi 0, %s64
    %s82 = sphi 0, %s82
    %s84 = sphi 0, %s82
    %s85 = sphi 0, %s84
    %s99 = sphi 0, %s85
    %s107 = sphi 0, %s109
    %s110 = sphi 0, %s107
    %s111 = sphi 0, %s110
    %s127 = sphi 0, %s111
    %s135 = sphi 0, %s137
    %s138 = sphi 0, %s135
    %s139 = sphi 0, %s138
    %s155 = sphi 0, %s139
    %s163 = sphi 0, %s165
    %s166 = sphi 0, %s163
    %s167 = sphi 0, %s166
    %s183 = sphi 0, %s167
    %s189 = sphi 0, %s191
    %s192 = sphi 0, %s189
    %s193 = sphi 0, %s192
    %s209 = sphi 0, %s193
  $region4: #{danet_forward.2} parent=0 // loop_header_branch
    %16 = sbr.rel (%p14) target = $region8
  $region5: #{danet_forward.2} parent=0 // loop_body
    %s18 = ssub.s32 %s13, 1
    %s19 = ssub.s32 %s13, 2
    %s26 = sadd.s32 1, %s21
    %p27 = scmp.ge.s32.totalorder %s26, 1
    %s28 = scalar_select %p27, 0, %s26
    %s29 = sadd.s32 1, %s20
    %s30 = scalar_select %p27, %s29, %s20
    %p31 = scmp.ge.s32.totalorder %s30, 2
    %s32 = scalar_select %p31, 0, %s30
    %s33 = ssub.s32 %s20, %s32
    %s34 = ssub.s32 %s21, %s28
    %s35 = sor.u32 %s33, %s34
    %p36 = scmp.eq.s32.totalorder %s35, 0
    %s38 = sadd.s32 %s37, 1
    %s39 = scalar_select %p36, %s37, %s38
    %p42 = pneg %p36
    %p43 = scmp.eq.s32.totalorder %s13, 1
    %p44 = por %p42, %p43
    %p45 = scmp.ne.s32.totalorder %s37, %s40
    %p46 = scmp.eq.s32.totalorder %s13, 0
    %p47 = por %p45, %p46
    %p48 = scmp.ne.s32.totalorder %s37, %s40
    %p49 = scmp.eq.s32.totalorder %s18, 1
    %p50 = por %p48, %p49
    %p51 = scmp.ne.s32.totalorder %s40, %s41
    %p52 = scmp.eq.s32.totalorder %s18, 0
    %p53 = por %p51, %p52
    %p54 = scmp.ne.s32.totalorder %s40, %s41
    %p55 = scmp.eq.s32.totalorder %s19, 1
    %p56 = por %p54, %p55
    %p58 = scmp.ne.s32.totalorder %s41, %s57
    %p59 = scmp.eq.s32.totalorder %s19, 0
    %p60 = por %p58, %p59
    %s62 = sadd.s32 %s61, 1
    %p65 = scmp.eq.s32.totalorder %s13, 1
    %p66 = scmp.ne.s32.totalorder %s61, %s63
    %p67 = scmp.eq.s32.totalorder %s13, 0
    %p68 = por %p66, %p67
    %p69 = scmp.ne.s32.totalorder %s61, %s63
    %p70 = scmp.eq.s32.totalorder %s18, 1
    %p71 = por %p69, %p70
    %p72 = scmp.ne.s32.totalorder %s63, %s64
    %p73 = scmp.eq.s32.totalorder %s18, 0
    %p74 = por %p72, %p73
    %p75 = scmp.ne.s32.totalorder %s63, %s64
    %p76 = scmp.eq.s32.totalorder %s19, 1
    %p77 = por %p75, %p76
    %p79 = scmp.ne.s32.totalorder %s64, %s78
    %p80 = scmp.eq.s32.totalorder %s19, 0
    %p81 = por %p79, %p80
    %s83 = sadd.s32 %s82, 1
    %p86 = scmp.eq.s32.totalorder %s13, 1
    %p87 = scmp.ne.s32.totalorder %s82, %s84
    %p88 = scmp.eq.s32.totalorder %s13, 0
    %p89 = por %p87, %p88
    %p90 = scmp.ne.s32.totalorder %s82, %s84
    %p91 = scmp.eq.s32.totalorder %s18, 1
    %p92 = por %p90, %p91
    %p93 = scmp.ne.s32.totalorder %s84, %s85
    %p94 = scmp.eq.s32.totalorder %s18, 0
    %p95 = por %p93, %p94
    %p96 = scmp.ne.s32.totalorder %s84, %s85
    %p97 = scmp.eq.s32.totalorder %s19, 1
    %p98 = por %p96, %p97
    %p100 = scmp.ne.s32.totalorder %s85, %s99
    %p101 = scmp.eq.s32.totalorder %s19, 0
    %p102 = por %p100, %p101
    %s103 = ssub.s32 %s20, %s32
    %s104 = ssub.s32 %s21, %s28
    %s105 = sor.u32 %s103, %s104
    %p106 = scmp.eq.s32.totalorder %s105, 0
    %s108 = sadd.s32 %s107, 1
    %s109 = scalar_select %p106, %s107, %s108
    %p112 = pneg %p106
    %p113 = scmp.eq.s32.totalorder %s13, 1
    %p114 = por %p112, %p113
    %p115 = scmp.ne.s32.totalorder %s107, %s110
    %p116 = scmp.eq.s32.totalorder %s13, 0
    %p117 = por %p115, %p116
    %p118 = scmp.ne.s32.totalorder %s107, %s110
    %p119 = scmp.eq.s32.totalorder %s18, 1
    %p120 = por %p118, %p119
    %p121 = scmp.ne.s32.totalorder %s110, %s111
    %p122 = scmp.eq.s32.totalorder %s18, 0
    %p123 = por %p121, %p122
    %p124 = scmp.ne.s32.totalorder %s110, %s111
    %p125 = scmp.eq.s32.totalorder %s19, 1
    %p126 = por %p124, %p125
    %p128 = scmp.ne.s32.totalorder %s111, %s127
    %p129 = scmp.eq.s32.totalorder %s19, 0
    %p130 = por %p128, %p129
    %s131 = ssub.s32 %s20, %s32
    %s132 = ssub.s32 %s21, %s28
    %s133 = sor.u32 %s131, %s132
    %p134 = scmp.eq.s32.totalorder %s133, 0
    %s136 = sadd.s32 %s135, 1
    %s137 = scalar_select %p134, %s135, %s136
    %p140 = pneg %p134
    %p141 = scmp.eq.s32.totalorder %s13, 1
    %p142 = por %p140, %p141
    %p143 = scmp.ne.s32.totalorder %s135, %s138
    %p144 = scmp.eq.s32.totalorder %s13, 0
    %p145 = por %p143, %p144
    %p146 = scmp.ne.s32.totalorder %s135, %s138
    %p147 = scmp.eq.s32.totalorder %s18, 1
    %p148 = por %p146, %p147
    %p149 = scmp.ne.s32.totalorder %s138, %s139
    %p150 = scmp.eq.s32.totalorder %s18, 0
    %p151 = por %p149, %p150
    %p152 = scmp.ne.s32.totalorder %s138, %s139
    %p153 = scmp.eq.s32.totalorder %s19, 1
    %p154 = por %p152, %p153
    %p156 = scmp.ne.s32.totalorder %s139, %s155
    %p157 = scmp.eq.s32.totalorder %s19, 0
    %p158 = por %p156, %p157
    %s159 = ssub.s32 %s20, %s32
    %s160 = ssub.s32 %s21, %s28
    %s161 = sor.u32 %s159, %s160
    %p162 = scmp.eq.s32.totalorder %s161, 0
    %s164 = sadd.s32 %s163, 1
    %s165 = scalar_select %p162, %s163, %s164
    %p168 = pneg %p162
    %p169 = scmp.eq.s32.totalorder %s13, 1
    %p170 = por %p168, %p169
    %p171 = scmp.ne.s32.totalorder %s163, %s166
    %p172 = scmp.eq.s32.totalorder %s13, 0
    %p173 = por %p171, %p172
    %p174 = scmp.ne.s32.totalorder %s163, %s166
    %p175 = scmp.eq.s32.totalorder %s18, 1
    %p176 = por %p174, %p175
    %p177 = scmp.ne.s32.totalorder %s166, %s167
    %p178 = scmp.eq.s32.totalorder %s18, 0
    %p179 = por %p177, %p178
    %p180 = scmp.ne.s32.totalorder %s166, %s167
    %p181 = scmp.eq.s32.totalorder %s19, 1
    %p182 = por %p180, %p181
    %p184 = scmp.ne.s32.totalorder %s167, %s183
    %p185 = scmp.eq.s32.totalorder %s19, 0
    %p186 = por %p184, %p185
    %s187 = ssub.s32 %s20, %s32
    %p188 = scmp.eq.s32.totalorder %s187, 0
    %s190 = sadd.s32 %s189, 1
    %s191 = scalar_select %p188, %s189, %s190
    %p194 = pneg %p188
    %p195 = scmp.eq.s32.totalorder %s13, 1
    %p196 = por %p194, %p195
    %p197 = scmp.ne.s32.totalorder %s189, %s192
    %p198 = scmp.eq.s32.totalorder %s13, 0
    %p199 = por %p197, %p198
    %p200 = scmp.ne.s32.totalorder %s189, %s192
    %p201 = scmp.eq.s32.totalorder %s18, 1
    %p202 = por %p200, %p201
    %p203 = scmp.ne.s32.totalorder %s192, %s193
    %p204 = scmp.eq.s32.totalorder %s18, 0
    %p205 = por %p203, %p204
    %p206 = scmp.ne.s32.totalorder %s192, %s193
    %p207 = scmp.eq.s32.totalorder %s19, 1
    %p208 = por %p206, %p207
    %p210 = scmp.ne.s32.totalorder %s193, %s209
    %p211 = scmp.eq.s32.totalorder %s19, 0
    %p212 = por %p210, %p211
    %p213 = scmp.le.s32.totalorder 1, %s13
    %p214 = scmp.lt.s32.totalorder %s13, 3
    %p215 = pnand %p213, %p214
    %p216 = pneg %p215
    // Predicated region
    $region9: #{danet_forward.2} parent=5 // pred_check
      _
    $region10: #{danet_forward.2} parent=5 // pred_check_branch
      %218 = sbr.rel (%p215) target = $region12
    $region11: #{danet_forward.2} parent=5 // pred_region
      %s219 = ssub.s32 %s13, 1
      // Predicated region
      $region13: #{danet_forward.2} parent=11 // pred_check
        %p220 = pneg %p74
      $region14: #{danet_forward.2} parent=11 // pred_check_branch
        %222 = sbr.rel (%p220) target = $region16
      $region15: #{danet_forward.2} parent=11 // pred_region
        _
      $region16: #{danet_forward.2} parent=11 // pred_fallthru
        _
      // Predicated region
      $region17: #{danet_forward.2} parent=11 // pred_check
        %p223 = pneg %p95
      $region18: #{danet_forward.2} parent=11 // pred_check_branch
        %225 = sbr.rel (%p223) target = $region20
      $region19: #{danet_forward.2} parent=11 // pred_region
        _
      $region20: #{danet_forward.2} parent=11 // pred_fallthru
        _
    $region12: #{danet_forward.2} parent=5 // pred_fallthru
      _
    %p226 = scmp.lt.s32.totalorder %s13, 2
    // Predicated region
    $region21: #{danet_forward.2} parent=5 // pred_check
      %p227 = pneg %p226
    $region22: #{danet_forward.2} parent=5 // pred_check_branch
      %229 = sbr.rel (%p227) target = $region24
    $region23: #{danet_forward.2} parent=5 // pred_region
      // Predicated region
      $region25: #{danet_forward.2} parent=23 // pred_check
        %p230 = pneg %p47
      $region26: #{danet_forward.2} parent=23 // pred_check_branch
        %232 = sbr.rel (%p230) target = $region28
      $region27: #{danet_forward.2} parent=23 // pred_region
        %s233 = smul.u32 2, %s21
        %p234 = scmp.lt.s32.totalorder %s20, 1
        %s235 = scalar_select %p234, %s20, 1
        %p236 = scmp.lt.s32.totalorder %s233, 1
        %s237 = scalar_select %p236, %s233, 1
        %s238 = smul.addr %s235, 2
        %s239 = sadd.s32 %s237, %s238
        %s240 = smul.addr %s239, 4
        %s241 = scalar_lea.vmem %s0, %s240
        %s242 = smul.u32 2, %s21
      $region28: #{danet_forward.2} parent=23 // pred_fallthru
        _
    $region24: #{danet_forward.2} parent=5 // pred_fallthru
      _
    %p243 = scmp.le.s32.totalorder 1, %s13
    %p244 = scmp.lt.s32.totalorder %s13, 3
    %p245 = pnand %p243, %p244
    %p246 = pneg %p245
    // Predicated region
    $region29: #{danet_forward.2} parent=5 // pred_check
      _
    $region30: #{danet_forward.2} parent=5 // pred_check_branch
      %248 = sbr.rel (%p245) target = $region32
    $region31: #{danet_forward.2} parent=5 // pred_region
      %s249 = ssub.s32 %s13, 1
      %s250 = smul.u32 2, %s23
      %p251 = scmp.lt.s32.totalorder %s22, 1
      %s252 = scalar_select %p251, %s22, 1
      %p253 = scmp.lt.s32.totalorder %s250, 1
      %s254 = scalar_select %p253, %s250, 1
      %s255 = smul.addr %s252, 2
      %s256 = sadd.s32 %s254, %s255
      %s257 = smul.addr %s256, 4
      %s258 = scalar_lea.vmem %s0, %s257
      %p259 = pneg %p53
      %p260 = pneg %p50
      %p261 = pneg %p74
      %p262 = pneg %p71
      %p263 = pneg %p95
      %p264 = pneg %p92
      %p265 = pneg %p123
      %p266 = pneg %p120
      %s267 = smul.u32 2, %s23
      %p268 = scmp.lt.s32.totalorder %s22, 1
      %s269 = scalar_select %p268, %s22, 1
      %p270 = scmp.lt.s32.totalorder %s267, 1
      %s271 = scalar_select %p270, %s267, 1
      %s272 = smul.addr %s269, 2
      %s273 = sadd.s32 %s271, %s272
      %s274 = smul.addr %s273, 4
      %s275 = scalar_lea.vmem %s3, %s274
      %p276 = pneg %p151
      %p277 = pneg %p148
      %s278 = smul.u32 2, %s23
      %p279 = scmp.lt.s32.totalorder %s22, 1
      %s280 = scalar_select %p279, %s22, 1
      %p281 = scmp.lt.s32.totalorder %s278, 1
      %s282 = scalar_select %p281, %s278, 1
      %s283 = smul.addr %s280, 2
      %s284 = sadd.s32 %s282, %s283
      %s285 = smul.addr %s284, 4
      %s286 = scalar_lea.vmem %s4, %s285
      %p287 = pneg %p179
      %p288 = pneg %p176
      %s289 = smul.u32 2, %s23
      %p290 = scmp.lt.s32.totalorder %s22, 1
      %s291 = scalar_select %p290, %s22, 1
      %p292 = scmp.lt.s32.totalorder %s289, 1
      %s293 = scalar_select %p292, %s289, 1
      %s294 = smul.addr %s291, 2
      %s295 = sadd.s32 %s293, %s294
      %s296 = smul.addr %s295, 4
      %s297 = scalar_lea.vmem %s5, %s296
      %p298 = pneg %p205
      %p299 = pneg %p202
      %p300 = scmp.lt.s32.totalorder %s22, 1
      %s301 = scalar_select %p300, %s22, 1
      %s302 = smul.addr %s301, 4
      %s303 = scalar_lea.vmem %s6, %s302
      %s304 = smul.u32 2, %s23
      %p305 = scmp.lt.s32.totalorder %s22, 1
      %s306 = scalar_select %p305, %s22, 1
      %p307 = scmp.lt.s32.totalorder %s304, 1
      %s308 = scalar_select %p307, %s304, 1
      %s309 = smul.addr %s306, 2
      %s310 = sadd.s32 %s308, %s309
      %s311 = smul.addr %s310, 4
      %s312 = scalar_lea.vmem %s0, %s311
      %s313 = smul.u32 2, %s23
      %s314 = smul.u32 2, %s23
      %p315 = scmp.lt.s32.totalorder %s22, 1
      %s316 = scalar_select %p315, %s22, 1
      %p317 = scmp.lt.s32.totalorder %s314, 1
      %s318 = scalar_select %p317, %s314, 1
      %s319 = smul.addr %s316, 2
      %s320 = sadd.s32 %s318, %s319
      %s321 = smul.addr %s320, 4
      %s322 = scalar_lea.vmem %s3, %s321
      %s323 = smul.u32 2, %s23
      %s324 = smul.u32 2, %s23
      %p325 = scmp.lt.s32.totalorder %s22, 1
      %s326 = scalar_select %p325, %s22, 1
      %p327 = scmp.lt.s32.totalorder %s324, 1
      %s328 = scalar_select %p327, %s324, 1
      %s329 = smul.addr %s326, 2
      %s330 = sadd.s32 %s328, %s329
      %s331 = smul.addr %s330, 4
      %s332 = scalar_lea.vmem %s4, %s331
      %s333 = smul.u32 2, %s23
      %s334 = smul.u32 2, %s23
      %p335 = scmp.lt.s32.totalorder %s22, 1
      %s336 = scalar_select %p335, %s22, 1
      %p337 = scmp.lt.s32.totalorder %s334, 1
      %s338 = scalar_select %p337, %s334, 1
      %s339 = smul.addr %s336, 2
      %s340 = sadd.s32 %s338, %s339
      %s341 = smul.addr %s340, 4
      %s342 = scalar_lea.vmem %s5, %s341
      %s343 = smul.u32 2, %s23
      %p344 = scmp.lt.s32.totalorder %s22, 1
      %s345 = scalar_select %p344, %s22, 1
      %s346 = smul.addr %s345, 4
      %s347 = scalar_lea.vmem %s6, %s346
      %v349 = vld [vmem:[%s312] sm:$0xff]
      %v350 = vld [vmem:[%s1] sm:$0xf]
      %v351 = vld [vmem:[%s1 + $0x4] sm:$0xf]
      %v352 = vld [vmem:[%s1 + $0x8] sm:$0xf]
      %v353 = vld [vmem:[%s2] sm:$0xff]
      %v354 = vld [vmem:[%s2 + $0x8] sm:$0xff]
      %v355 = vld [vmem:[%s2 + $0x10] sm:$0xff]
      %357 = vset.pattern.permute.xlu0 0
      %358 = vperm.xlu0 %357, %v353
      %v359 = vpop.permute.xlu0 %358
      %362 = vset.pattern.permute.xlu0 0
      %363 = vperm.xlu0 %362, %v354
      %v364 = vpop.permute.xlu0 %363
      %367 = vset.pattern.permute.xlu0 0
      %368 = vperm.xlu0 %367, %v355
      %v369 = vpop.permute.xlu0 %368
      %v374 = vunpack.c.l.b16 %v350
      %v375 = vunpack.c.l.b16 %v351
      %v376 = vunpack.c.l.b16 %v352
      %v377 = vpack.c.b16 %v375, %v374
      %v378 = vpack.c.b16 %v376, %v376
      %v380 = vunpack.c.l.b16 %v349
      %v381 = vunpack.c.h.b16 %v349
      %v382 = vpack.c.b16 %v380, %v380
      %v383 = vpack.c.b16 %v381, %v381
      %vm384 = vcmask 64512
      %v386 = vsel %vm384, %v377, 0
      %v389 = vsel %vm384, %v378, 0
      %vm391 = vcmask 1043456
      %v393 = vsel %vm391, %v382, 0
      %v396 = vsel %vm391, %v383, 0
      %398 = vmatprep.subr.bf16.mxu0 0
      %399 = vmatpush1.bf16.msra.mxu0 0
      %400 = vmatprep.subr.bf16.mxu0 0
      %401 = vmatpush1.bf16.msra.mxu0 0
      %402 = vmatprep.subr.bf16.mxu0 0
      %403 = vmatpush1.bf16.msra.mxu0 0
      %404 = vmatprep.subr.bf16.mxu0 0
      %405 = vmatpush1.bf16.msra.mxu0 0
      %406 = vmatprep.subr.bf16.mxu0 0
      %407 = vmatpush1.bf16.msra.mxu0 0
      %408 = vmatprep.subr.bf16.mxu0 0
      %409 = vmatpush1.bf16.msra.mxu0 0
      %410 = vmatprep.subr.bf16.mxu0 0
      %411 = vmatpush1.bf16.msra.mxu0 0
      %412 = vmatprep.subr.bf16.mxu0 %v396
      %413 = vmatpush1.bf16.msra.mxu0 %v393
      %414 = vmatprep.subr.bf16.mxu0 0
      %415 = vmatpush2.bf16.msra.mxu0 0
      %416 = vmatprep.subr.bf16.mxu0 0
      %417 = vmatpush2.bf16.msra.mxu0 0
      %418 = vmatprep.subr.bf16.mxu0 0
      %419 = vmatpush2.bf16.msra.mxu0 0
      %420 = vmatprep.subr.bf16.mxu0 0
      %421 = vmatpush2.bf16.msra.mxu0 0
      %422 = vmatprep.subr.bf16.mxu0 0
      %423 = vmatpush2.bf16.msra.mxu0 0
      %424 = vmatprep.subr.bf16.mxu0 0
      %425 = vmatpush2.bf16.msra.mxu0 0
      %426 = vmatprep.subr.bf16.mxu0 0
      %427 = vmatpush2.bf16.msra.mxu0 0
      %428 = vmatprep.subr.bf16.mxu0 0
      %429 = vmatpush2.bf16.msra.mxu0 0
      %430 = vmatprep.mubr.bf16.mxu0 0
      %431 = vmatmul.mubr.bf16.gmra.mxu0 %v386
      %v432 = vpop.f32.mrf.mxu0
      %v433 = vadd.f32 %v359, %v432
      %v434 = vpop.f32.mrf.mxu0
      %v435 = vadd.f32 %v359, %v434
      %v436 = vpop.f32.mrf.mxu0
      %v437 = vadd.f32 %v364, %v436
      %v438 = vpop.f32.mrf.mxu0
      %v439 = vadd.f32 %v364, %v438
      %440 = vmatprep.mubr.bf16.mxu0 0
      %441 = vmatmul.mubr.bf16.gmra.mxu0 %v389
      %v442 = vpop.f32.mrf.mxu0
      %v443 = vadd.f32 %v369, %v442
      %v444 = vpop.f32.mrf.mxu0
      %v445 = vadd.f32 %v369, %v444
      %v446 = vpop.f32.mrf.mxu0
      %v447 = vpop.f32.mrf.mxu0
      %448 = vdwg.mxu0
      %v449 = vpack.c.bf16 %v433, %v433
      %v450 = vpack.c.bf16 %v435, %v435
      %v453 = vunpack.c.l.b16 %v449
      %v454 = vunpack.c.l.b16 %v450
      %v455 = vpack.c.b16 %v454, %v453
      %457 = vst [vmem:[%s342] sm:$0xff] %v455
      %v458 = vpack.c.bf16 %v437, %v437
      %v459 = vpack.c.bf16 %v439, %v439
      %v462 = vunpack.c.l.b16 %v458
      %v463 = vunpack.c.l.b16 %v459
      %v464 = vpack.c.b16 %v463, %v462
      %466 = vst [vmem:[%s322] sm:$0xff] %v464
      %v467 = vpack.c.bf16 %v443, %v443
      %v468 = vpack.c.bf16 %v445, %v445
      %v471 = vunpack.c.l.b16 %v467
      %v472 = vunpack.c.l.b16 %v468
      %v473 = vpack.c.b16 %v472, %v471
      %475 = vst [vmem:[%s332] sm:$0xff] %v473
      %p476 = scmp.eq.s32.totalorder %s23, 0
      // Predicated region
      $region33: #{danet_forward.2} parent=31 // pred_check
        %p477 = pneg %p476
      $region34: #{danet_forward.2} parent=31 // pred_check_branch
        %479 = sbr.rel (%p477) target = $region36
      $region35: #{danet_forward.2} parent=31 // pred_region
        %480 = vst.msk [vmem:[#allocation2] sm:$0xff] %vm384, 0.0
      $region36: #{danet_forward.2} parent=31 // pred_fallthru
        _
      %v481 = vld [vmem:[#allocation2] sm:$0xff]
      %484 = vmatprep.subr.bf16.mxu0 0
      %485 = vmatpush1.bf16.xpose.msra.mxu0 0
      %486 = vmatprep.subr.bf16.mxu0 0
      %487 = vmatpush1.bf16.xpose.msra.mxu0 0
      %488 = vmatprep.subr.bf16.mxu0 0
      %489 = vmatpush1.bf16.xpose.msra.mxu0 0
      %490 = vmatprep.subr.bf16.mxu0 0
      %491 = vmatpush1.bf16.xpose.msra.mxu0 0
      %492 = vmatprep.subr.bf16.mxu0 0
      %493 = vmatpush1.bf16.xpose.msra.mxu0 0
      %494 = vmatprep.subr.bf16.mxu0 0
      %495 = vmatpush1.bf16.xpose.msra.mxu0 0
      %496 = vmatprep.subr.bf16.mxu0 0
      %497 = vmatpush1.bf16.xpose.msra.mxu0 0
      %498 = vmatprep.subr.bf16.mxu0 %v383
      %499 = vmatpush1.bf16.xpose.msra.mxu0 %v382
      %500 = vmatprep.subr.bf16.mxu0 0
      %501 = vmatpush2.bf16.xpose.msra.mxu0 0
      %502 = vmatprep.subr.bf16.mxu0 0
      %503 = vmatpush2.bf16.xpose.msra.mxu0 0
      %504 = vmatprep.subr.bf16.mxu0 0
      %505 = vmatpush2.bf16.xpose.msra.mxu0 0
      %506 = vmatprep.subr.bf16.mxu0 0
      %507 = vmatpush2.bf16.xpose.msra.mxu0 0
      %508 = vmatprep.subr.bf16.mxu0 0
      %509 = vmatpush2.bf16.xpose.msra.mxu0 0
      %510 = vmatprep.subr.bf16.mxu0 0
      %511 = vmatpush2.bf16.xpose.msra.mxu0 0
      %512 = vmatprep.subr.bf16.mxu0 0
      %513 = vmatpush2.bf16.xpose.msra.mxu0 0
      %514 = vmatprep.subr.bf16.mxu0 0
      %515 = vmatpush2.bf16.xpose.msra.mxu0 0
      %516 = vmatprep.mubr.bf16.mxu0 %v383
      %517 = vmatmul.mubr.bf16.gmra.mxu0 %v382
      %v518 = vpop.f32.mrf.mxu0
      %v519 = vadd.f32 0.0, %v518
      %v520 = vpop.f32.mrf.mxu0
      %v521 = vpop.f32.mrf.mxu0
      %v522 = vpop.f32.mrf.mxu0
      %523 = vdwg.mxu0
      %v524 = vadd.f32 %v481, %v519
      %525 = vst.msk [vmem:[#allocation2] sm:$0xff] %vm384, %v524
      // Predicated region
      $region37: #{danet_forward.2} parent=31 // pred_check
        %p526 = pneg %p476
      $region38: #{danet_forward.2} parent=31 // pred_check_branch
        %528 = sbr.rel (%p526) target = $region40
      $region39: #{danet_forward.2} parent=31 // pred_region
        %v529 = vld [vmem:[#allocation2] sm:$0xff]
        %v530 = vsel %vm384, %v529, inf
        %531 = vmin.xlane.f32.xlu0 %v530
        %v532 = vpop.xlane.xlu0 %531
        %v533 = vsub.f32 %v532, %v529
        %v534 = vmul.f32 %v533, 1.442695
        %v535 = vpow.pop %v534
        %v536 = vsel %vm384, %v535, 0.0
        %537 = vadd.xlane.f32.xlu0 %v536
        %v538 = vpop.xlane.xlu0 %537
        %v539 = vrcp.pop %v538
        %v540 = vmul.f32 %v535, %v539
        %v541 = vpack.c.bf16 %v540, %v540
        %vm542 = vcmask 60416
        %543 = vst.msk [vmem:[%s347] sm:$0xf] %vm542, %v541
      $region40: #{danet_forward.2} parent=31 // pred_fallthru
        _
      %s544 = smul.u32 2, %s23
      %p545 = scmp.lt.s32.totalorder %s22, 1
      %s546 = scalar_select %p545, %s22, 1
      %p547 = scmp.lt.s32.totalorder %s544, 1
      %s548 = scalar_select %p547, %s544, 1
      %s549 = smul.addr %s546, 2
      %s550 = sadd.s32 %s548, %s549
      %s551 = smul.addr %s550, 4
      %s552 = scalar_lea.vmem %s3, %s551
      %s553 = smul.u32 2, %s23
      %p554 = scmp.lt.s32.totalorder %s22, 1
      %s555 = scalar_select %p554, %s22, 1
      %p556 = scmp.lt.s32.totalorder %s553, 1
      %s557 = scalar_select %p556, %s553, 1
      %s558 = smul.addr %s555, 2
      %s559 = sadd.s32 %s557, %s558
      %s560 = smul.addr %s559, 4
      %s561 = scalar_lea.vmem %s4, %s560
      %s562 = smul.u32 2, %s23
      %p563 = scmp.lt.s32.totalorder %s22, 1
      %s564 = scalar_select %p563, %s22, 1
      %p565 = scmp.lt.s32.totalorder %s562, 1
      %s566 = scalar_select %p565, %s562, 1
      %s567 = smul.addr %s564, 2
      %s568 = sadd.s32 %s566, %s567
      %s569 = smul.addr %s568, 4
      %s570 = scalar_lea.vmem %s5, %s569
      %p571 = scmp.lt.s32.totalorder %s22, 1
      %s572 = scalar_select %p571, %s22, 1
      %s573 = smul.addr %s572, 4
      %s574 = scalar_lea.vmem %s6, %s573
      // Predicated region
      $region41: #{danet_forward.2} parent=31 // pred_check
        %p575 = pneg %p120
      $region42: #{danet_forward.2} parent=31 // pred_check_branch
        %577 = sbr.rel (%p575) target = $region44
      $region43: #{danet_forward.2} parent=31 // pred_region
        %s578 = smul.u32 2, %s23
      $region44: #{danet_forward.2} parent=31 // pred_fallthru
        _
      // Predicated region
      $region45: #{danet_forward.2} parent=31 // pred_check
        %p579 = pneg %p148
      $region46: #{danet_forward.2} parent=31 // pred_check_branch
        %581 = sbr.rel (%p579) target = $region48
      $region47: #{danet_forward.2} parent=31 // pred_region
        %s582 = smul.u32 2, %s23
      $region48: #{danet_forward.2} parent=31 // pred_fallthru
        _
      // Predicated region
      $region49: #{danet_forward.2} parent=31 // pred_check
        %p583 = pneg %p176
      $region50: #{danet_forward.2} parent=31 // pred_check_branch
        %585 = sbr.rel (%p583) target = $region52
      $region51: #{danet_forward.2} parent=31 // pred_region
        %s586 = smul.u32 2, %s23
      $region52: #{danet_forward.2} parent=31 // pred_fallthru
        _
      // Predicated region
      $region53: #{danet_forward.2} parent=31 // pred_check
        %p587 = pneg %p202
      $region54: #{danet_forward.2} parent=31 // pred_check_branch
        %589 = sbr.rel (%p587) target = $region56
      $region55: #{danet_forward.2} parent=31 // pred_region
        _
      $region56: #{danet_forward.2} parent=31 // pred_fallthru
        _
    $region32: #{danet_forward.2} parent=5 // pred_fallthru
      _
    %p590 = scmp.le.s32.totalorder 2, %s13
    // Predicated region
    $region57: #{danet_forward.2} parent=5 // pred_check
      %p591 = pneg %p590
    $region58: #{danet_forward.2} parent=5 // pred_check_branch
      %593 = sbr.rel (%p591) target = $region60
    $region59: #{danet_forward.2} parent=5 // pred_region
      %s594 = ssub.s32 %s13, 2
      // Predicated region
      $region61: #{danet_forward.2} parent=59 // pred_check
        %p595 = pneg %p126
      $region62: #{danet_forward.2} parent=59 // pred_check_branch
        %597 = sbr.rel (%p595) target = $region64
      $region63: #{danet_forward.2} parent=59 // pred_region
        %s598 = smul.u32 2, %s25
        %p599 = scmp.lt.s32.totalorder %s24, 1
        %s600 = scalar_select %p599, %s24, 1
        %p601 = scmp.lt.s32.totalorder %s598, 1
        %s602 = scalar_select %p601, %s598, 1
        %s603 = smul.addr %s600, 2
        %s604 = sadd.s32 %s602, %s603
        %s605 = smul.addr %s604, 4
        %s606 = scalar_lea.vmem %s3, %s605
      $region64: #{danet_forward.2} parent=59 // pred_fallthru
        _
      // Predicated region
      $region65: #{danet_forward.2} parent=59 // pred_check
        %p607 = pneg %p154
      $region66: #{danet_forward.2} parent=59 // pred_check_branch
        %609 = sbr.rel (%p607) target = $region68
      $region67: #{danet_forward.2} parent=59 // pred_region
        %s610 = smul.u32 2, %s25
        %p611 = scmp.lt.s32.totalorder %s24, 1
        %s612 = scalar_select %p611, %s24, 1
        %p613 = scmp.lt.s32.totalorder %s610, 1
        %s614 = scalar_select %p613, %s610, 1
        %s615 = smul.addr %s612, 2
        %s616 = sadd.s32 %s614, %s615
        %s617 = smul.addr %s616, 4
        %s618 = scalar_lea.vmem %s4, %s617
      $region68: #{danet_forward.2} parent=59 // pred_fallthru
        _
      // Predicated region
      $region69: #{danet_forward.2} parent=59 // pred_check
        %p619 = pneg %p182
      $region70: #{danet_forward.2} parent=59 // pred_check_branch
        %621 = sbr.rel (%p619) target = $region72
      $region71: #{danet_forward.2} parent=59 // pred_region
        %s622 = smul.u32 2, %s25
        %p623 = scmp.lt.s32.totalorder %s24, 1
        %s624 = scalar_select %p623, %s24, 1
        %p625 = scmp.lt.s32.totalorder %s622, 1
        %s626 = scalar_select %p625, %s622, 1
        %s627 = smul.addr %s624, 2
        %s628 = sadd.s32 %s626, %s627
        %s629 = smul.addr %s628, 4
        %s630 = scalar_lea.vmem %s5, %s629
      $region72: #{danet_forward.2} parent=59 // pred_fallthru
        _
      // Predicated region
      $region73: #{danet_forward.2} parent=59 // pred_check
        %p631 = pneg %p208
      $region74: #{danet_forward.2} parent=59 // pred_check_branch
        %633 = sbr.rel (%p631) target = $region76
      $region75: #{danet_forward.2} parent=59 // pred_region
        %p634 = scmp.lt.s32.totalorder %s24, 1
        %s635 = scalar_select %p634, %s24, 1
        %s636 = smul.addr %s635, 4
        %s637 = scalar_lea.vmem %s6, %s636
      $region76: #{danet_forward.2} parent=59 // pred_fallthru
        _
    $region60: #{danet_forward.2} parent=5 // pred_fallthru
      _
  $region6: #{danet_forward.2} parent=0 // loop_footer
    %s17 = sadd.s32 1, %s13
  $region7: #{danet_forward.2} parent=0 // loop_footer_branch
    %12 = sbr.rel target = $region3
  $region8: #{danet_forward.2} parent=0 // loop_exit
    _

// kernel: danet_forward.3
$region0: #{danet_forward.3}
  #allocation0 [shape = 'u32[]', space=smem, size = 0x4, offset = 0x4, fixed_abs, tag = 'smem constant byte address 0x4 - core index']
  #allocation1 [shape = 'u32[144,128]{1,0:T(1,128)}', space=vmem, size = 0x12000, scoped, tag = 'internal scratch']
  #allocation2 [shape = 'f32[1,256]{1,0:T(1,128)}', space=vmem, size = 0x400, scoped, tag = 'scratch operand']
  #allocation3 [shape = 'f32[1,256]{1,0:T(1,128)}', space=vmem, size = 0x400, scoped, tag = 'scratch operand']
  #allocation4 [shape = 'f32[8,256]{1,0:T(8,128)}', space=vmem, size = 0x2000, scoped, tag = 'scratch operand']
  %s0 = inlined_call_operand.vmem [shape: f32[2], index: 0, kind: input, shape index: {}]
  %s1 = inlined_call_operand.vmem [shape: bf16[2,8,8], index: 1, kind: input, shape index: {}]
  %s2 = inlined_call_operand.vmem [shape: bf16[2,8,256], index: 2, kind: input, shape index: {}]
  %s3 = inlined_call_operand.vmem [shape: bf16[2,8,256], index: 3, kind: input, shape index: {}]
  %s4 = inlined_call_operand.vmem [shape: bf16[2,8,256], index: 4, kind: input, shape index: {}]
  %s5 = inlined_call_operand.vmem [shape: bf16[2,8,256], index: 5, kind: input, shape index: {}]
  %s6 = inlined_call_operand.vmem [shape: f32[2,8,256], index: 6, kind: output, shape index: {}]
  %s7 = sld [smem:[#allocation0]]
  $region69: #{danet_forward.3} parent=0
    _
  %s9 = ssub.s32 1, %s7
  %s10 = scalar_select 0, %s9, %s7
  $region1: #{danet_forward.3} parent=0
    #allocation5 [shape = 'u8[512]{0}', space=smem, size = 0x200, scoped, tag = 'input window, operand 0, single buffered']
    #allocation6 [shape = 's32[2]{0}', space=sflag, size = 0x8, scoped, tag = 'scoped memory for danet_forward.3']
    %11 = vsyncpa [#allocation6], 0
    loop: start=0, step=1, limit=4
    $region2: #{danet_forward.3} parent=1 // loop_pre_header
      _
    $region3: #{danet_forward.3} parent=1 // loop_header
      %s13 = sphi 0, %s17
      %p14 = scmp.ge.s32.totalorder %s13, 4
      %s20 = sphi 0, %s39
      %s21 = sphi 0, %s35
      %s22 = sphi 0, %s31
      %s23 = sphi 0, %s20
      %s24 = sphi 0, %s21
      %s25 = sphi 0, %s22
      %s26 = sphi 0, %s23
      %s27 = sphi 0, %s24
      %s28 = sphi 0, %s25
      %s40 = sphi 0, %s40
      %s42 = sphi 0, %s40
      %s43 = sphi 0, %s42
      %s57 = sphi 0, %s43
      %s63 = sphi 0, %s65
      %s66 = sphi 0, %s63
      %s67 = sphi 0, %s66
      %s83 = sphi 0, %s67
      %s91 = sphi 0, %s93
      %s94 = sphi 0, %s91
      %s95 = sphi 0, %s94
      %s111 = sphi 0, %s95
      %s119 = sphi 0, %s121
      %s122 = sphi 0, %s119
      %s123 = sphi 0, %s122
      %s139 = sphi 0, %s123
      %s145 = sphi 0, %s147
      %s148 = sphi 0, %s145
      %s149 = sphi 0, %s148
      %s165 = sphi 0, %s149
      %s171 = sphi 0, %s173
      %s174 = sphi 0, %s171
      %s175 = sphi 0, %s174
      %s191 = sphi 0, %s175
      %s199 = sphi 0, %s201
      %s202 = sphi 0, %s199
      %s203 = sphi 0, %s202
      %s219 = sphi 0, %s203
    $region4: #{danet_forward.3} parent=1 // loop_header_branch
      %16 = sbr.rel (%p14) target = $region8
    $region5: #{danet_forward.3} parent=1 // loop_body
      %s18 = ssub.s32 %s13, 1
      %s19 = ssub.s32 %s13, 2
      %s29 = sadd.s32 1, %s22
      %p30 = scmp.ge.s32.totalorder %s29, 1
      %s31 = scalar_select %p30, 0, %s29
      %s32 = sadd.s32 1, %s21
      %s33 = scalar_select %p30, %s32, %s21
      %p34 = scmp.ge.s32.totalorder %s33, 1
      %s35 = scalar_select %p34, 0, %s33
      %s36 = sadd.s32 1, %s20
      %s37 = scalar_select %p34, %s36, %s20
      %p38 = scmp.ge.s32.totalorder %s37, 2
      %s39 = scalar_select %p38, 0, %s37
      %s41 = sadd.s32 %s40, 1
      %p44 = scmp.eq.s32.totalorder %s13, 1
      %p45 = scmp.ne.s32.totalorder %s40, %s42
      %p46 = scmp.eq.s32.totalorder %s13, 0
      %p47 = por %p45, %p46
      %p48 = scmp.ne.s32.totalorder %s40, %s42
      %p49 = scmp.eq.s32.totalorder %s18, 1
      %p50 = por %p48, %p49
      %p51 = scmp.ne.s32.totalorder %s42, %s43
      %p52 = scmp.eq.s32.totalorder %s18, 0
      %p53 = por %p51, %p52
      %p54 = scmp.ne.s32.totalorder %s42, %s43
      %p55 = scmp.eq.s32.totalorder %s19, 1
      %p56 = por %p54, %p55
      %p58 = scmp.ne.s32.totalorder %s43, %s57
      %p59 = scmp.eq.s32.totalorder %s19, 0
      %p60 = por %p58, %p59
      %s61 = ssub.s32 %s20, %s39
      %p62 = scmp.eq.s32.totalorder %s61, 0
      %s64 = sadd.s32 %s63, 1
      %s65 = scalar_select %p62, %s63, %s64
      %p68 = pneg %p62
      %p69 = scmp.eq.s32.totalorder %s13, 1
      %p70 = por %p68, %p69
      %p71 = scmp.ne.s32.totalorder %s63, %s66
      %p72 = scmp.eq.s32.totalorder %s13, 0
      %p73 = por %p71, %p72
      %p74 = scmp.ne.s32.totalorder %s63, %s66
      %p75 = scmp.eq.s32.totalorder %s18, 1
      %p76 = por %p74, %p75
      %p77 = scmp.ne.s32.totalorder %s66, %s67
      %p78 = scmp.eq.s32.totalorder %s18, 0
      %p79 = por %p77, %p78
      %p80 = scmp.ne.s32.totalorder %s66, %s67
      %p81 = scmp.eq.s32.totalorder %s19, 1
      %p82 = por %p80, %p81
      %p84 = scmp.ne.s32.totalorder %s67, %s83
      %p85 = scmp.eq.s32.totalorder %s19, 0
      %p86 = por %p84, %p85
      %s87 = ssub.s32 %s20, %s39
      %s88 = ssub.s32 %s21, %s35
      %s89 = sor.u32 %s87, %s88
      %p90 = scmp.eq.s32.totalorder %s89, 0
      %s92 = sadd.s32 %s91, 1
      %s93 = scalar_select %p90, %s91, %s92
      %p96 = pneg %p90
      %p97 = scmp.eq.s32.totalorder %s13, 1
      %p98 = por %p96, %p97
      %p99 = scmp.ne.s32.totalorder %s91, %s94
      %p100 = scmp.eq.s32.totalorder %s13, 0
      %p101 = por %p99, %p100
      %p102 = scmp.ne.s32.totalorder %s91, %s94
      %p103 = scmp.eq.s32.totalorder %s18, 1
      %p104 = por %p102, %p103
      %p105 = scmp.ne.s32.totalorder %s94, %s95
      %p106 = scmp.eq.s32.totalorder %s18, 0
      %p107 = por %p105, %p106
      %p108 = scmp.ne.s32.totalorder %s94, %s95
      %p109 = scmp.eq.s32.totalorder %s19, 1
      %p110 = por %p108, %p109
      %p112 = scmp.ne.s32.totalorder %s95, %s111
      %p113 = scmp.eq.s32.totalorder %s19, 0
      %p114 = por %p112, %p113
      %s115 = ssub.s32 %s20, %s39
      %s116 = ssub.s32 %s21, %s35
      %s117 = sor.u32 %s115, %s116
      %p118 = scmp.eq.s32.totalorder %s117, 0
      %s120 = sadd.s32 %s119, 1
      %s121 = scalar_select %p118, %s119, %s120
      %p124 = pneg %p118
      %p125 = scmp.eq.s32.totalorder %s13, 1
      %p126 = por %p124, %p125
      %p127 = scmp.ne.s32.totalorder %s119, %s122
      %p128 = scmp.eq.s32.totalorder %s13, 0
      %p129 = por %p127, %p128
      %p130 = scmp.ne.s32.totalorder %s119, %s122
      %p131 = scmp.eq.s32.totalorder %s18, 1
      %p132 = por %p130, %p131
      %p133 = scmp.ne.s32.totalorder %s122, %s123
      %p134 = scmp.eq.s32.totalorder %s18, 0
      %p135 = por %p133, %p134
      %p136 = scmp.ne.s32.totalorder %s122, %s123
      %p137 = scmp.eq.s32.totalorder %s19, 1
      %p138 = por %p136, %p137
      %p140 = scmp.ne.s32.totalorder %s123, %s139
      %p141 = scmp.eq.s32.totalorder %s19, 0
      %p142 = por %p140, %p141
      %s143 = ssub.s32 %s20, %s39
      %p144 = scmp.eq.s32.totalorder %s143, 0
      %s146 = sadd.s32 %s145, 1
      %s147 = scalar_select %p144, %s145, %s146
      %p150 = pneg %p144
      %p151 = scmp.eq.s32.totalorder %s13, 1
      %p152 = por %p150, %p151
      %p153 = scmp.ne.s32.totalorder %s145, %s148
      %p154 = scmp.eq.s32.totalorder %s13, 0
      %p155 = por %p153, %p154
      %p156 = scmp.ne.s32.totalorder %s145, %s148
      %p157 = scmp.eq.s32.totalorder %s18, 1
      %p158 = por %p156, %p157
      %p159 = scmp.ne.s32.totalorder %s148, %s149
      %p160 = scmp.eq.s32.totalorder %s18, 0
      %p161 = por %p159, %p160
      %p162 = scmp.ne.s32.totalorder %s148, %s149
      %p163 = scmp.eq.s32.totalorder %s19, 1
      %p164 = por %p162, %p163
      %p166 = scmp.ne.s32.totalorder %s149, %s165
      %p167 = scmp.eq.s32.totalorder %s19, 0
      %p168 = por %p166, %p167
      %s169 = ssub.s32 %s20, %s39
      %p170 = scmp.eq.s32.totalorder %s169, 0
      %s172 = sadd.s32 %s171, 1
      %s173 = scalar_select %p170, %s171, %s172
      %p176 = pneg %p170
      %p177 = scmp.eq.s32.totalorder %s13, 1
      %p178 = por %p176, %p177
      %p179 = scmp.ne.s32.totalorder %s171, %s174
      %p180 = scmp.eq.s32.totalorder %s13, 0
      %p181 = por %p179, %p180
      %p182 = scmp.ne.s32.totalorder %s171, %s174
      %p183 = scmp.eq.s32.totalorder %s18, 1
      %p184 = por %p182, %p183
      %p185 = scmp.ne.s32.totalorder %s174, %s175
      %p186 = scmp.eq.s32.totalorder %s18, 0
      %p187 = por %p185, %p186
      %p188 = scmp.ne.s32.totalorder %s174, %s175
      %p189 = scmp.eq.s32.totalorder %s19, 1
      %p190 = por %p188, %p189
      %p192 = scmp.ne.s32.totalorder %s175, %s191
      %p193 = scmp.eq.s32.totalorder %s19, 0
      %p194 = por %p192, %p193
      %s195 = ssub.s32 %s20, %s39
      %s196 = ssub.s32 %s21, %s35
      %s197 = sor.u32 %s195, %s196
      %p198 = scmp.eq.s32.totalorder %s197, 0
      %s200 = sadd.s32 %s199, 1
      %s201 = scalar_select %p198, %s199, %s200
      %p204 = pneg %p198
      %p205 = scmp.eq.s32.totalorder %s13, 1
      %p206 = por %p204, %p205
      %p207 = scmp.ne.s32.totalorder %s199, %s202
      %p208 = scmp.eq.s32.totalorder %s13, 0
      %p209 = por %p207, %p208
      %p210 = scmp.ne.s32.totalorder %s199, %s202
      %p211 = scmp.eq.s32.totalorder %s18, 1
      %p212 = por %p210, %p211
      %p213 = scmp.ne.s32.totalorder %s202, %s203
      %p214 = scmp.eq.s32.totalorder %s18, 0
      %p215 = por %p213, %p214
      %p216 = scmp.ne.s32.totalorder %s202, %s203
      %p217 = scmp.eq.s32.totalorder %s19, 1
      %p218 = por %p216, %p217
      %p220 = scmp.ne.s32.totalorder %s203, %s219
      %p221 = scmp.eq.s32.totalorder %s19, 0
      %p222 = por %p220, %p221
      %p223 = scmp.le.s32.totalorder 1, %s13
      %p224 = scmp.lt.s32.totalorder %s13, 3
      %p225 = pnand %p223, %p224
      %p226 = pneg %p225
      // Predicated region
      $region9: #{danet_forward.3} parent=5 // pred_check
        _
      $region10: #{danet_forward.3} parent=5 // pred_check_branch
        %228 = sbr.rel (%p225) target = $region12
      $region11: #{danet_forward.3} parent=5 // pred_region
        %s229 = ssub.s32 %s13, 1
        // Predicated region
        $region13: #{danet_forward.3} parent=11 // pred_check
          %p230 = pneg %p53
        $region14: #{danet_forward.3} parent=11 // pred_check_branch
          %232 = sbr.rel (%p230) target = $region16
        $region15: #{danet_forward.3} parent=11 // pred_region
          %s234 = ssub.s32 16, 16
          %235 = vsyncadd [#allocation6], %s234
          %s237 = sshll.u32 %s0, 4
          %s238 = int_to_ptr.vmem [resolvable:$true] %s237
          %240 = dma.vmem_to_smem %s238, 16, [#allocation5], [#allocation6]
        $region16: #{danet_forward.3} parent=11 // pred_fallthru
          _
      $region12: #{danet_forward.3} parent=5 // pred_fallthru
        _
      %p241 = scmp.lt.s32.totalorder %s13, 2
      // Predicated region
      $region17: #{danet_forward.3} parent=5 // pred_check
        %p242 = pneg %p241
      $region18: #{danet_forward.3} parent=5 // pred_check_branch
        %244 = sbr.rel (%p242) target = $region20
      $region19: #{danet_forward.3} parent=5 // pred_region
        // Predicated region
        $region21: #{danet_forward.3} parent=19 // pred_check
          %p245 = pneg %p73
        $region22: #{danet_forward.3} parent=19 // pred_check_branch
          %247 = sbr.rel (%p245) target = $region24
        $region23: #{danet_forward.3} parent=19 // pred_region
          %p248 = scmp.lt.s32.totalorder %s20, 1
          %s249 = scalar_select %p248, %s20, 1
          %s250 = smul.addr %s249, 4
          %s251 = scalar_lea.vmem %s1, %s250
        $region24: #{danet_forward.3} parent=19 // pred_fallthru
          _
        // Predicated region
        $region25: #{danet_forward.3} parent=19 // pred_check
          %p252 = pneg %p101
        $region26: #{danet_forward.3} parent=19 // pred_check_branch
          %254 = sbr.rel (%p252) target = $region28
        $region27: #{danet_forward.3} parent=19 // pred_region
          %s255 = smul.u32 2, %s21
          %p256 = scmp.lt.s32.totalorder %s20, 1
          %s257 = scalar_select %p256, %s20, 1
          %p258 = scmp.lt.s32.totalorder %s255, 1
          %s259 = scalar_select %p258, %s255, 1
          %s260 = smul.addr %s257, 2
          %s261 = sadd.s32 %s259, %s260
          %s262 = smul.addr %s261, 4
          %s263 = scalar_lea.vmem %s2, %s262
          %s264 = smul.u32 2, %s21
        $region28: #{danet_forward.3} parent=19 // pred_fallthru
          _
        // Predicated region
        $region29: #{danet_forward.3} parent=19 // pred_check
          %p265 = pneg %p129
        $region30: #{danet_forward.3} parent=19 // pred_check_branch
          %267 = sbr.rel (%p265) target = $region32
        $region31: #{danet_forward.3} parent=19 // pred_region
          %s268 = smul.u32 2, %s21
          %p269 = scmp.lt.s32.totalorder %s20, 1
          %s270 = scalar_select %p269, %s20, 1
          %p271 = scmp.lt.s32.totalorder %s268, 1
          %s272 = scalar_select %p271, %s268, 1
          %s273 = smul.addr %s270, 2
          %s274 = sadd.s32 %s272, %s273
          %s275 = smul.addr %s274, 4
          %s276 = scalar_lea.vmem %s3, %s275
          %s277 = smul.u32 2, %s21
        $region32: #{danet_forward.3} parent=19 // pred_fallthru
          _
        // Predicated region
        $region33: #{danet_forward.3} parent=19 // pred_check
          %p278 = pneg %p155
        $region34: #{danet_forward.3} parent=19 // pred_check_branch
          %280 = sbr.rel (%p278) target = $region36
        $region35: #{danet_forward.3} parent=19 // pred_region
          %p281 = scmp.lt.s32.totalorder %s20, 1
          %s282 = scalar_select %p281, %s20, 1
          %s283 = smul.addr %s282, 2
          %s284 = smul.addr %s283, 4
          %s285 = scalar_lea.vmem %s4, %s284
        $region36: #{danet_forward.3} parent=19 // pred_fallthru
          _
        // Predicated region
        $region37: #{danet_forward.3} parent=19 // pred_check
          %p286 = pneg %p181
        $region38: #{danet_forward.3} parent=19 // pred_check_branch
          %288 = sbr.rel (%p286) target = $region40
        $region39: #{danet_forward.3} parent=19 // pred_region
          %p289 = scmp.lt.s32.totalorder %s20, 1
          %s290 = scalar_select %p289, %s20, 1
          %s291 = smul.addr %s290, 2
          %s292 = smul.addr %s291, 4
          %s293 = scalar_lea.vmem %s5, %s292
        $region40: #{danet_forward.3} parent=19 // pred_fallthru
          _
      $region20: #{danet_forward.3} parent=5 // pred_fallthru
        _
      %p294 = scmp.le.s32.totalorder 1, %s13
      %p295 = scmp.lt.s32.totalorder %s13, 3
      %p296 = pnand %p294, %p295
      %p297 = pneg %p296
      // Predicated region
      $region41: #{danet_forward.3} parent=5 // pred_check
        _
      $region42: #{danet_forward.3} parent=5 // pred_check_branch
        %299 = sbr.rel (%p296) target = $region44
      $region43: #{danet_forward.3} parent=5 // pred_region
        %s300 = ssub.s32 %s13, 1
        // Predicated region
        $region45: #{danet_forward.3} parent=43 // pred_check
          %p301 = pneg %p53
        $region46: #{danet_forward.3} parent=43 // pred_check_branch
          %303 = sbr.rel (%p301) target = $region48
        $region47: #{danet_forward.3} parent=43 // pred_region
          %304 = dma.done [#allocation6], 16
        $region48: #{danet_forward.3} parent=43 // pred_fallthru
          _
        %305 = sfence
        %p306 = pneg %p53
        %p307 = pneg %p50
        %p308 = scmp.lt.s32.totalorder %s23, 1
        %s309 = scalar_select %p308, %s23, 1
        %s310 = smul.addr %s309, 4
        %s311 = scalar_lea.vmem %s1, %s310
        %p312 = pneg %p79
        %p313 = pneg %p76
        %s314 = smul.u32 2, %s24
        %p315 = scmp.lt.s32.totalorder %s23, 1
        %s316 = scalar_select %p315, %s23, 1
        %p317 = scmp.lt.s32.totalorder %s314, 1
        %s318 = scalar_select %p317, %s314, 1
        %s319 = smul.addr %s316, 2
        %s320 = sadd.s32 %s318, %s319
        %s321 = smul.addr %s320, 4
        %s322 = scalar_lea.vmem %s2, %s321
        %p323 = pneg %p107
        %p324 = pneg %p104
        %s325 = smul.u32 2, %s24
        %p326 = scmp.lt.s32.totalorder %s23, 1
        %s327 = scalar_select %p326, %s23, 1
        %p328 = scmp.lt.s32.totalorder %s325, 1
        %s329 = scalar_select %p328, %s325, 1
        %s330 = smul.addr %s327, 2
        %s331 = sadd.s32 %s329, %s330
        %s332 = smul.addr %s331, 4
        %s333 = scalar_lea.vmem %s3, %s332
        %p334 = pneg %p135
        %p335 = pneg %p132
        %p336 = scmp.lt.s32.totalorder %s23, 1
        %s337 = scalar_select %p336, %s23, 1
        %s338 = smul.addr %s337, 2
        %s339 = smul.addr %s338, 4
        %s340 = scalar_lea.vmem %s4, %s339
        %p341 = pneg %p161
        %p342 = pneg %p158
        %p343 = scmp.lt.s32.totalorder %s23, 1
        %s344 = scalar_select %p343, %s23, 1
        %s345 = smul.addr %s344, 2
        %s346 = smul.addr %s345, 4
        %s347 = scalar_lea.vmem %s5, %s346
        %p348 = pneg %p187
        %p349 = pneg %p184
        %p350 = pneg %p215
        %p351 = pneg %p212
        %s352 = smul.u32 2, %s24
        %p353 = scmp.lt.s32.totalorder %s23, 1
        %s354 = scalar_select %p353, %s23, 1
        %p355 = scmp.lt.s32.totalorder %s352, 1
        %s356 = scalar_select %p355, %s352, 1
        %s357 = smul.addr %s354, 2
        %s358 = sadd.s32 %s356, %s357
        %s359 = smul.addr %s358, 8
        %s360 = scalar_lea.vmem %s6, %s359
        %p361 = scmp.lt.s32.totalorder %s23, 1
        %s362 = scalar_select %p361, %s23, 1
        %s363 = smul.addr %s362, 4
        %s364 = scalar_lea.vmem %s1, %s363
        %s365 = smul.u32 2, %s24
        %p366 = scmp.lt.s32.totalorder %s23, 1
        %s367 = scalar_select %p366, %s23, 1
        %p368 = scmp.lt.s32.totalorder %s365, 1
        %s369 = scalar_select %p368, %s365, 1
        %s370 = smul.addr %s367, 2
        %s371 = sadd.s32 %s369, %s370
        %s372 = smul.addr %s371, 4
        %s373 = scalar_lea.vmem %s2, %s372
        %s374 = smul.u32 2, %s24
        %s375 = smul.u32 2, %s24
        %p376 = scmp.lt.s32.totalorder %s23, 1
        %s377 = scalar_select %p376, %s23, 1
        %p378 = scmp.lt.s32.totalorder %s375, 1
        %s379 = scalar_select %p378, %s375, 1
        %s380 = smul.addr %s377, 2
        %s381 = sadd.s32 %s379, %s380
        %s382 = smul.addr %s381, 4
        %s383 = scalar_lea.vmem %s3, %s382
        %s384 = smul.u32 2, %s24
        %p385 = scmp.lt.s32.totalorder %s23, 1
        %s386 = scalar_select %p385, %s23, 1
        %s387 = smul.addr %s386, 2
        %s388 = smul.addr %s387, 4
        %s389 = scalar_lea.vmem %s4, %s388
        %p390 = scmp.lt.s32.totalorder %s23, 1
        %s391 = scalar_select %p390, %s23, 1
        %s392 = smul.addr %s391, 2
        %s393 = smul.addr %s392, 4
        %s394 = scalar_lea.vmem %s5, %s393
        %s395 = smul.u32 2, %s24
        %p396 = scmp.lt.s32.totalorder %s23, 1
        %s397 = scalar_select %p396, %s23, 1
        %p398 = scmp.lt.s32.totalorder %s395, 1
        %s399 = scalar_select %p398, %s395, 1
        %s400 = smul.addr %s397, 2
        %s401 = sadd.s32 %s399, %s400
        %s402 = smul.addr %s401, 8
        %s403 = scalar_lea.vmem %s6, %s402
        %s404 = smul.u32 2, %s24
        %p406 = scmp.eq.s32.totalorder %s25, 0
        // Predicated region
        $region49: #{danet_forward.3} parent=43 // pred_check
          %p407 = pneg %p406
        $region50: #{danet_forward.3} parent=43 // pred_check_branch
          %409 = sbr.rel (%p407) target = $region52
        $region51: #{danet_forward.3} parent=43 // pred_region
          %v410 = vlaneseq
          %vm411 = vcmp.ge.s32.totalorder %v410, 0
          %vm412 = vcmp.lt.s32.totalorder %v410, 256
          %vm413 = vmand %vm411, %vm412
          %414 = vst.msk [vmem:[#allocation2] sm:$0x3] %vm413, -inf
          %415 = vst.msk [vmem:[#allocation3] sm:$0x3] %vm413, 0.0
          %416 = vst [vmem:[#allocation4] sm:$0xff] 0.0
          %417 = vst [vmem:[#allocation4 + $0x8] sm:$0xff] 0.0
        $region52: #{danet_forward.3} parent=43 // pred_fallthru
          _
        %v418 = vld [vmem:[%s383] sm:$0xff]
        %s419 = smul.u32 %s25, 256
        %s420 = sshra.s32 %s419, 7
        %s421 = sand.u32 %s419, 127
        %s422 = smul.addr %s420, 4
        %s423 = scalar_lea.vmem %s389, %s422
        %v424 = vld [vmem:[%s423] sm:$0xff]
        %s425 = smul.addr %s420, 4
        %s426 = scalar_lea.vmem %s394, %s425
        %v427 = vld [vmem:[%s426] sm:$0xff]
        %v429 = vunpack.c.l.b16 %v424
        %v430 = vunpack.c.h.b16 %v424
        %v431 = vpack.c.b16 %v429, %v429
        %v432 = vpack.c.b16 %v430, %v430
        %435 = vxpose.xlu0.c.b16.start [1/8] %v431, 128
        %436 = vxpose.xlu0.c.b16.cont [2/8] 0, 128
        %437 = vxpose.xlu0.c.b16.cont [3/8] 0, 128
        %438 = vxpose.xlu0.c.b16.cont [4/8] 0, 128
        %439 = vxpose.xlu0.c.b16.cont [5/8] 0, 128
        %440 = vxpose.xlu0.c.b16.cont [6/8] 0, 128
        %441 = vxpose.xlu0.c.b16.cont [7/8] 0, 128
        %442 = vxpose.xlu0.c.b16.end [8/8] 0, 128
        %v443 = vpop.trf.xlu0
        %v444 = vpop.trf.xlu0
        %v445 = vpop.trf.xlu0
        %v446 = vpop.trf.xlu0
        %v447 = vpop.trf.xlu0
        %v448 = vpop.trf.xlu0
        %v449 = vpop.trf.xlu0
        %v450 = vpop.trf.xlu0
        %451 = vxpose.xlu0.c.b16.start [1/8] %v432, 128
        %452 = vxpose.xlu0.c.b16.cont [2/8] 0, 128
        %453 = vxpose.xlu0.c.b16.cont [3/8] 0, 128
        %454 = vxpose.xlu0.c.b16.cont [4/8] 0, 128
        %455 = vxpose.xlu0.c.b16.cont [5/8] 0, 128
        %456 = vxpose.xlu0.c.b16.cont [6/8] 0, 128
        %457 = vxpose.xlu0.c.b16.cont [7/8] 0, 128
        %458 = vxpose.xlu0.c.b16.end [8/8] 0, 128
        %v459 = vpop.trf.xlu0
        %v460 = vpop.trf.xlu0
        %v461 = vpop.trf.xlu0
        %v462 = vpop.trf.xlu0
        %v463 = vpop.trf.xlu0
        %v464 = vpop.trf.xlu0
        %v465 = vpop.trf.xlu0
        %v466 = vpop.trf.xlu0
        %v468 = vunpack.c.l.b16 %v418
        %v469 = vunpack.c.h.b16 %v418
        %v470 = vpack.c.b16 %v468, %v468
        %v471 = vpack.c.b16 %v469, %v469
        %vm472 = vcmask 64512
        %v474 = vsel %vm472, %v443, 0
        %v477 = vsel %vm472, %v444, 0
        %v480 = vsel %vm472, %v445, 0
        %v483 = vsel %vm472, %v446, 0
        %v486 = vsel %vm472, %v447, 0
        %v489 = vsel %vm472, %v448, 0
        %v492 = vsel %vm472, %v449, 0
        %v495 = vsel %vm472, %v450, 0
        %v498 = vsel %vm472, %v459, 0
        %v501 = vsel %vm472, %v460, 0
        %v504 = vsel %vm472, %v461, 0
        %v507 = vsel %vm472, %v462, 0
        %v510 = vsel %vm472, %v463, 0
        %v513 = vsel %vm472, %v464, 0
        %v516 = vsel %vm472, %v465, 0
        %v519 = vsel %vm472, %v466, 0
        %vm521 = vcmask 1043456
        %v523 = vsel %vm521, %v470, 0
        %v526 = vsel %vm521, %v471, 0
        %528 = vmatprep.subr.bf16.mxu0 0
        %529 = vmatpush1.bf16.msra.mxu0 0
        %530 = vmatprep.subr.bf16.mxu0 0
        %531 = vmatpush1.bf16.msra.mxu0 0
        %532 = vmatprep.subr.bf16.mxu0 0
        %533 = vmatpush1.bf16.msra.mxu0 0
        %534 = vmatprep.subr.bf16.mxu0 0
        %535 = vmatpush1.bf16.msra.mxu0 0
        %536 = vmatprep.subr.bf16.mxu0 0
        %537 = vmatpush1.bf16.msra.mxu0 0
        %538 = vmatprep.subr.bf16.mxu0 0
        %539 = vmatpush1.bf16.msra.mxu0 0
        %540 = vmatprep.subr.bf16.mxu0 0
        %541 = vmatpush1.bf16.msra.mxu0 0
        %542 = vmatprep.subr.bf16.mxu0 %v526
        %543 = vmatpush1.bf16.msra.mxu0 %v523
        %544 = vmatprep.subr.bf16.mxu0 0
        %545 = vmatpush2.bf16.msra.mxu0 0
        %546 = vmatprep.subr.bf16.mxu0 0
        %547 = vmatpush2.bf16.msra.mxu0 0
        %548 = vmatprep.subr.bf16.mxu0 0
        %549 = vmatpush2.bf16.msra.mxu0 0
        %550 = vmatprep.subr.bf16.mxu0 0
        %551 = vmatpush2.bf16.msra.mxu0 0
        %552 = vmatprep.subr.bf16.mxu0 0
        %553 = vmatpush2.bf16.msra.mxu0 0
        %554 = vmatprep.subr.bf16.mxu0 0
        %555 = vmatpush2.bf16.msra.mxu0 0
        %556 = vmatprep.subr.bf16.mxu0 0
        %557 = vmatpush2.bf16.msra.mxu0 0
        %558 = vmatprep.subr.bf16.mxu0 0
        %559 = vmatpush2.bf16.msra.mxu0 0
        %560 = vmatprep.mubr.bf16.mxu0 0
        %561 = vmatmul.mubr.bf16.gmra.mxu0 %v474
        %v562 = vpop.f32.mrf.mxu0
        %v563 = vadd.f32 0.0, %v562
        %v564 = vpop.f32.mrf.mxu0
        %v565 = vadd.f32 0.0, %v564
        %v566 = vpop.f32.mrf.mxu0
        %v567 = vadd.f32 0.0, %v566
        %v568 = vpop.f32.mrf.mxu0
        %v569 = vadd.f32 0.0, %v568
        %570 = vmatprep.mubr.bf16.mxu0 0
        %571 = vmatmul.mubr.bf16.gmra.mxu0 %v477
        %v572 = vpop.f32.mrf.mxu0
        %v573 = vadd.f32 0.0, %v572
        %v574 = vpop.f32.mrf.mxu0
        %v575 = vadd.f32 0.0, %v574
        %v576 = vpop.f32.mrf.mxu0
        %v577 = vadd.f32 0.0, %v576
        %v578 = vpop.f32.mrf.mxu0
        %v579 = vadd.f32 0.0, %v578
        %580 = vmatprep.mubr.bf16.mxu0 0
        %581 = vmatmul.mubr.bf16.gmra.mxu0 %v480
        %v582 = vpop.f32.mrf.mxu0
        %v583 = vadd.f32 0.0, %v582
        %v584 = vpop.f32.mrf.mxu0
        %v585 = vadd.f32 0.0, %v584
        %v586 = vpop.f32.mrf.mxu0
        %v587 = vadd.f32 0.0, %v586
        %v588 = vpop.f32.mrf.mxu0
        %v589 = vadd.f32 0.0, %v588
        %590 = vmatprep.mubr.bf16.mxu0 0
        %591 = vmatmul.mubr.bf16.gmra.mxu0 %v483
        %v592 = vpop.f32.mrf.mxu0
        %v593 = vadd.f32 0.0, %v592
        %v594 = vpop.f32.mrf.mxu0
        %v595 = vadd.f32 0.0, %v594
        %v596 = vpop.f32.mrf.mxu0
        %v597 = vadd.f32 0.0, %v596
        %v598 = vpop.f32.mrf.mxu0
        %v599 = vadd.f32 0.0, %v598
        %600 = vmatprep.mubr.bf16.mxu0 0
        %601 = vmatmul.mubr.bf16.gmra.mxu0 %v486
        %v602 = vpop.f32.mrf.mxu0
        %v603 = vadd.f32 0.0, %v602
        %v604 = vpop.f32.mrf.mxu0
        %v605 = vadd.f32 0.0, %v604
        %v606 = vpop.f32.mrf.mxu0
        %v607 = vadd.f32 0.0, %v606
        %v608 = vpop.f32.mrf.mxu0
        %v609 = vadd.f32 0.0, %v608
        %610 = vmatprep.mubr.bf16.mxu0 0
        %611 = vmatmul.mubr.bf16.gmra.mxu0 %v489
        %v612 = vpop.f32.mrf.mxu0
        %v613 = vadd.f32 0.0, %v612
        %v614 = vpop.f32.mrf.mxu0
        %v615 = vadd.f32 0.0, %v614
        %v616 = vpop.f32.mrf.mxu0
        %v617 = vadd.f32 0.0, %v616
        %v618 = vpop.f32.mrf.mxu0
        %v619 = vadd.f32 0.0, %v618
        %620 = vmatprep.mubr.bf16.mxu0 0
        %621 = vmatmul.mubr.bf16.gmra.mxu0 %v492
        %v622 = vpop.f32.mrf.mxu0
        %v623 = vadd.f32 0.0, %v622
        %v624 = vpop.f32.mrf.mxu0
        %v625 = vadd.f32 0.0, %v624
        %v626 = vpop.f32.mrf.mxu0
        %v627 = vadd.f32 0.0, %v626
        %v628 = vpop.f32.mrf.mxu0
        %v629 = vadd.f32 0.0, %v628
        %630 = vmatprep.mubr.bf16.mxu0 0
        %631 = vmatmul.mubr.bf16.gmra.mxu0 %v495
        %v632 = vpop.f32.mrf.mxu0
        %v633 = vadd.f32 0.0, %v632
        %v634 = vpop.f32.mrf.mxu0
        %v635 = vadd.f32 0.0, %v634
        %v636 = vpop.f32.mrf.mxu0
        %v637 = vadd.f32 0.0, %v636
        %v638 = vpop.f32.mrf.mxu0
        %v639 = vadd.f32 0.0, %v638
        %640 = vmatprep.mubr.bf16.mxu0 0
        %641 = vmatmul.mubr.bf16.gmra.mxu0 %v498
        %v642 = vpop.f32.mrf.mxu0
        %v643 = vadd.f32 0.0, %v642
        %v644 = vpop.f32.mrf.mxu0
        %v645 = vadd.f32 0.0, %v644
        %v646 = vpop.f32.mrf.mxu0
        %v647 = vadd.f32 0.0, %v646
        %v648 = vpop.f32.mrf.mxu0
        %v649 = vadd.f32 0.0, %v648
        %650 = vmatprep.mubr.bf16.mxu0 0
        %651 = vmatmul.mubr.bf16.gmra.mxu0 %v501
        %v652 = vpop.f32.mrf.mxu0
        %v653 = vadd.f32 0.0, %v652
        %v654 = vpop.f32.mrf.mxu0
        %v655 = vadd.f32 0.0, %v654
        %v656 = vpop.f32.mrf.mxu0
        %v657 = vadd.f32 0.0, %v656
        %v658 = vpop.f32.mrf.mxu0
        %v659 = vadd.f32 0.0, %v658
        %660 = vmatprep.mubr.bf16.mxu0 0
        %661 = vmatmul.mubr.bf16.gmra.mxu0 %v504
        %v662 = vpop.f32.mrf.mxu0
        %v663 = vadd.f32 0.0, %v662
        %v664 = vpop.f32.mrf.mxu0
        %v665 = vadd.f32 0.0, %v664
        %v666 = vpop.f32.mrf.mxu0
        %v667 = vadd.f32 0.0, %v666
        %v668 = vpop.f32.mrf.mxu0
        %v669 = vadd.f32 0.0, %v668
        %670 = vmatprep.mubr.bf16.mxu0 0
        %671 = vmatmul.mubr.bf16.gmra.mxu0 %v507
        %v672 = vpop.f32.mrf.mxu0
        %v673 = vadd.f32 0.0, %v672
        %v674 = vpop.f32.mrf.mxu0
        %v675 = vadd.f32 0.0, %v674
        %v676 = vpop.f32.mrf.mxu0
        %v677 = vadd.f32 0.0, %v676
        %v678 = vpop.f32.mrf.mxu0
        %v679 = vadd.f32 0.0, %v678
        %680 = vmatprep.mubr.bf16.mxu0 0
        %681 = vmatmul.mubr.bf16.gmra.mxu0 %v510
        %v682 = vpop.f32.mrf.mxu0
        %v683 = vadd.f32 0.0, %v682
        %v684 = vpop.f32.mrf.mxu0
        %v685 = vadd.f32 0.0, %v684
        %v686 = vpop.f32.mrf.mxu0
        %v687 = vadd.f32 0.0, %v686
        %v688 = vpop.f32.mrf.mxu0
        %v689 = vadd.f32 0.0, %v688
        %690 = vmatprep.mubr.bf16.mxu0 0
        %691 = vmatmul.mubr.bf16.gmra.mxu0 %v513
        %v692 = vpop.f32.mrf.mxu0
        %v693 = vadd.f32 0.0, %v692
        %v694 = vpop.f32.mrf.mxu0
        %v695 = vadd.f32 0.0, %v694
        %v696 = vpop.f32.mrf.mxu0
        %v697 = vadd.f32 0.0, %v696
        %v698 = vpop.f32.mrf.mxu0
        %v699 = vadd.f32 0.0, %v698
        %700 = vmatprep.mubr.bf16.mxu0 0
        %701 = vmatmul.mubr.bf16.gmra.mxu0 %v516
        %v702 = vpop.f32.mrf.mxu0
        %v703 = vadd.f32 0.0, %v702
        %v704 = vpop.f32.mrf.mxu0
        %v705 = vadd.f32 0.0, %v704
        %v706 = vpop.f32.mrf.mxu0
        %v707 = vadd.f32 0.0, %v706
        %v708 = vpop.f32.mrf.mxu0
        %v709 = vadd.f32 0.0, %v708
        %710 = vmatprep.mubr.bf16.mxu0 0
        %711 = vmatmul.mubr.bf16.gmra.mxu0 %v519
        %v712 = vpop.f32.mrf.mxu0
        %v713 = vadd.f32 0.0, %v712
        %v714 = vpop.f32.mrf.mxu0
        %v715 = vadd.f32 0.0, %v714
        %v716 = vpop.f32.mrf.mxu0
        %v717 = vadd.f32 0.0, %v716
        %v718 = vpop.f32.mrf.mxu0
        %v719 = vadd.f32 0.0, %v718
        %720 = vdwg.mxu0
        %v721 = vmax.f32 %v563, %v573
        %v722 = vmax.f32 %v567, %v577
        %v723 = vmax.f32 %v721, %v583
        %v724 = vmax.f32 %v722, %v587
        %v725 = vmax.f32 %v723, %v593
        %v726 = vmax.f32 %v724, %v597
        %v727 = vmax.f32 %v725, %v603
        %v728 = vmax.f32 %v726, %v607
        %v729 = vmax.f32 %v727, %v613
        %v730 = vmax.f32 %v728, %v617
        %v731 = vmax.f32 %v729, %v623
        %v732 = vmax.f32 %v730, %v627
        %v733 = vmax.f32 %v731, %v633
        %v734 = vmax.f32 %v732, %v637
        %v735 = vmax.f32 %v733, %v643
        %v736 = vmax.f32 %v734, %v647
        %v737 = vmax.f32 %v735, %v653
        %v738 = vmax.f32 %v736, %v657
        %v739 = vmax.f32 %v737, %v663
        %v740 = vmax.f32 %v738, %v667
        %v741 = vmax.f32 %v739, %v673
        %v742 = vmax.f32 %v740, %v677
        %v743 = vmax.f32 %v741, %v683
        %v744 = vmax.f32 %v742, %v687
        %v745 = vmax.f32 %v743, %v693
        %v746 = vmax.f32 %v744, %v697
        %v747 = vmax.f32 %v745, %v703
        %v748 = vmax.f32 %v746, %v707
        %v749 = vmax.f32 %v747, %v713
        %v750 = vmax.f32 %v748, %v717
        %v751 = vmax.f32 %v749, %v750
        %v752 = vrot.slane %v751, 4
        %v753 = vmax.f32 %v751, %v752
        %v754 = vrot.slane %v753, 2
        %v755 = vmax.f32 %v753, %v754
        %v756 = vrot.slane %v755, 1
        %v757 = vmax.f32 %v755, %v756
        %v758 = vmax.f32 %v565, %v575
        %v759 = vmax.f32 %v569, %v579
        %v760 = vmax.f32 %v758, %v585
        %v761 = vmax.f32 %v759, %v589
        %v762 = vmax.f32 %v760, %v595
        %v763 = vmax.f32 %v761, %v599
        %v764 = vmax.f32 %v762, %v605
        %v765 = vmax.f32 %v763, %v609
        %v766 = vmax.f32 %v764, %v615
        %v767 = vmax.f32 %v765, %v619
        %v768 = vmax.f32 %v766, %v625
        %v769 = vmax.f32 %v767, %v629
        %v770 = vmax.f32 %v768, %v635
        %v771 = vmax.f32 %v769, %v639
        %v772 = vmax.f32 %v770, %v645
        %v773 = vmax.f32 %v771, %v649
        %v774 = vmax.f32 %v772, %v655
        %v775 = vmax.f32 %v773, %v659
        %v776 = vmax.f32 %v774, %v665
        %v777 = vmax.f32 %v775, %v669
        %v778 = vmax.f32 %v776, %v675
        %v779 = vmax.f32 %v777, %v679
        %v780 = vmax.f32 %v778, %v685
        %v781 = vmax.f32 %v779, %v689
        %v782 = vmax.f32 %v780, %v695
        %v783 = vmax.f32 %v781, %v699
        %v784 = vmax.f32 %v782, %v705
        %v785 = vmax.f32 %v783, %v709
        %v786 = vmax.f32 %v784, %v715
        %v787 = vmax.f32 %v785, %v719
        %v788 = vmax.f32 %v786, %v787
        %v789 = vrot.slane %v788, 4
        %v790 = vmax.f32 %v788, %v789
        %v791 = vrot.slane %v790, 2
        %v792 = vmax.f32 %v790, %v791
        %v793 = vrot.slane %v792, 1
        %v794 = vmax.f32 %v792, %v793
        %v795 = vld [vmem:[#allocation2] sm:$0x3]
        %v798 = vcombine.low %v757, %v794
        %v800 = vunpack.c.l.s4 1966171168
        %v801 = vunpack.c.0.s8 %v800
        %v802 = vlaneseq
        %v803 = vshrl.u32 %v802, 7
        %v804 = vsub.s32 %v801, %v803
        %v805 = vrot.slane %v798, %v804
        %v807 = vunpack.c.l.s4 1966171168
        %v808 = vunpack.c.0.s8 %v807
        %v809 = vlaneseq
        %v810 = vshrl.u32 %v809, 7
        %v811 = vsub.s32 %v808, %v810
        %v812 = vrot.slane %v805, %v811
        %v814 = vmax.f32 %v795, %v812
        %v815 = vsub.f32 %v795, %v814
        %v816 = vmul.f32 %v815, 1.442695
        %v817 = vpow.pop %v816
        %v819 = vlaneseq
        %v820 = vshrl.u32 %v819, 7
        %v821 = vsub.s32 0, %v820
        %v822 = vrot.slane %v814, %v821
        %v823 = vlaneseq
        %v824 = vshrl.u32 %v823, 7
        %v825 = vsub.s32 1, %v824
        %v826 = vrot.slane %v814, %v825
        %v829 = vsub.f32 %v563, %v822
        %v830 = vsub.f32 %v565, %v826
        %v831 = vsub.f32 %v567, %v822
        %v832 = vsub.f32 %v569, %v826
        %v833 = vsub.f32 %v573, %v822
        %v834 = vsub.f32 %v575, %v826
        %v835 = vsub.f32 %v577, %v822
        %v836 = vsub.f32 %v579, %v826
        %v837 = vsub.f32 %v583, %v822
        %v838 = vsub.f32 %v585, %v826
        %v839 = vsub.f32 %v587, %v822
        %v840 = vsub.f32 %v589, %v826
        %v841 = vsub.f32 %v593, %v822
        %v842 = vsub.f32 %v595, %v826
        %v843 = vsub.f32 %v597, %v822
        %v844 = vsub.f32 %v599, %v826
        %v845 = vsub.f32 %v603, %v822
        %v846 = vsub.f32 %v605, %v826
        %v847 = vsub.f32 %v607, %v822
        %v848 = vsub.f32 %v609, %v826
        %v849 = vsub.f32 %v613, %v822
        %v850 = vsub.f32 %v615, %v826
        %v851 = vsub.f32 %v617, %v822
        %v852 = vsub.f32 %v619, %v826
        %v853 = vsub.f32 %v623, %v822
        %v854 = vsub.f32 %v625, %v826
        %v855 = vsub.f32 %v627, %v822
        %v856 = vsub.f32 %v629, %v826
        %v857 = vsub.f32 %v633, %v822
        %v858 = vsub.f32 %v635, %v826
        %v859 = vsub.f32 %v637, %v822
        %v860 = vsub.f32 %v639, %v826
        %v861 = vsub.f32 %v643, %v822
        %v862 = vsub.f32 %v645, %v826
        %v863 = vsub.f32 %v647, %v822
        %v864 = vsub.f32 %v649, %v826
        %v865 = vsub.f32 %v653, %v822
        %v866 = vsub.f32 %v655, %v826
        %v867 = vsub.f32 %v657, %v822
        %v868 = vsub.f32 %v659, %v826
        %v869 = vsub.f32 %v663, %v822
        %v870 = vsub.f32 %v665, %v826
        %v871 = vsub.f32 %v667, %v822
        %v872 = vsub.f32 %v669, %v826
        %v873 = vsub.f32 %v673, %v822
        %v874 = vsub.f32 %v675, %v826
        %v875 = vsub.f32 %v677, %v822
        %v876 = vsub.f32 %v679, %v826
        %v877 = vsub.f32 %v683, %v822
        %v878 = vsub.f32 %v685, %v826
        %v879 = vsub.f32 %v687, %v822
        %v880 = vsub.f32 %v689, %v826
        %v881 = vsub.f32 %v693, %v822
        %v882 = vsub.f32 %v695, %v826
        %v883 = vsub.f32 %v697, %v822
        %v884 = vsub.f32 %v699, %v826
        %v885 = vsub.f32 %v703, %v822
        %v886 = vsub.f32 %v705, %v826
        %v887 = vsub.f32 %v707, %v822
        %v888 = vsub.f32 %v709, %v826
        %v889 = vsub.f32 %v713, %v822
        %v890 = vsub.f32 %v715, %v826
        %v891 = vsub.f32 %v717, %v822
        %v892 = vsub.f32 %v719, %v826
        %v893 = vmul.f32 %v829, 1.442695
        %v894 = vpow.pop %v893
        %v895 = vmul.f32 %v830, 1.442695
        %v896 = vpow.pop %v895
        %v897 = vmul.f32 %v831, 1.442695
        %v898 = vpow.pop %v897
        %v899 = vmul.f32 %v832, 1.442695
        %v900 = vpow.pop %v899
        %v901 = vmul.f32 %v833, 1.442695
        %v902 = vpow.pop %v901
        %v903 = vmul.f32 %v834, 1.442695
        %v904 = vpow.pop %v903
        %v905 = vmul.f32 %v835, 1.442695
        %v906 = vpow.pop %v905
        %v907 = vmul.f32 %v836, 1.442695
        %v908 = vpow.pop %v907
        %v909 = vmul.f32 %v837, 1.442695
        %v910 = vpow.pop %v909
        %v911 = vmul.f32 %v838, 1.442695
        %v912 = vpow.pop %v911
        %v913 = vmul.f32 %v839, 1.442695
        %v914 = vpow.pop %v913
        %v915 = vmul.f32 %v840, 1.442695
        %v916 = vpow.pop %v915
        %v917 = vmul.f32 %v841, 1.442695
        %v918 = vpow.pop %v917
        %v919 = vmul.f32 %v842, 1.442695
        %v920 = vpow.pop %v919
        %v921 = vmul.f32 %v843, 1.442695
        %v922 = vpow.pop %v921
        %v923 = vmul.f32 %v844, 1.442695
        %v924 = vpow.pop %v923
        %v925 = vmul.f32 %v845, 1.442695
        %v926 = vpow.pop %v925
        %v927 = vmul.f32 %v846, 1.442695
        %v928 = vpow.pop %v927
        %v929 = vmul.f32 %v847, 1.442695
        %v930 = vpow.pop %v929
        %v931 = vmul.f32 %v848, 1.442695
        %v932 = vpow.pop %v931
        %v933 = vmul.f32 %v849, 1.442695
        %v934 = vpow.pop %v933
        %v935 = vmul.f32 %v850, 1.442695
        %v936 = vpow.pop %v935
        %v937 = vmul.f32 %v851, 1.442695
        %v938 = vpow.pop %v937
        %v939 = vmul.f32 %v852, 1.442695
        %v940 = vpow.pop %v939
        %v941 = vmul.f32 %v853, 1.442695
        %v942 = vpow.pop %v941
        %v943 = vmul.f32 %v854, 1.442695
        %v944 = vpow.pop %v943
        %v945 = vmul.f32 %v855, 1.442695
        %v946 = vpow.pop %v945
        %v947 = vmul.f32 %v856, 1.442695
        %v948 = vpow.pop %v947
        %v949 = vmul.f32 %v857, 1.442695
        %v950 = vpow.pop %v949
        %v951 = vmul.f32 %v858, 1.442695
        %v952 = vpow.pop %v951
        %v953 = vmul.f32 %v859, 1.442695
        %v954 = vpow.pop %v953
        %v955 = vmul.f32 %v860, 1.442695
        %v956 = vpow.pop %v955
        %v957 = vmul.f32 %v861, 1.442695
        %v958 = vpow.pop %v957
        %v959 = vmul.f32 %v862, 1.442695
        %v960 = vpow.pop %v959
        %v961 = vmul.f32 %v863, 1.442695
        %v962 = vpow.pop %v961
        %v963 = vmul.f32 %v864, 1.442695
        %v964 = vpow.pop %v963
        %v965 = vmul.f32 %v865, 1.442695
        %v966 = vpow.pop %v965
        %v967 = vmul.f32 %v866, 1.442695
        %v968 = vpow.pop %v967
        %v969 = vmul.f32 %v867, 1.442695
        %v970 = vpow.pop %v969
        %v971 = vmul.f32 %v868, 1.442695
        %v972 = vpow.pop %v971
        %v973 = vmul.f32 %v869, 1.442695
        %v974 = vpow.pop %v973
        %v975 = vmul.f32 %v870, 1.442695
        %v976 = vpow.pop %v975
        %v977 = vmul.f32 %v871, 1.442695
        %v978 = vpow.pop %v977
        %v979 = vmul.f32 %v872, 1.442695
        %v980 = vpow.pop %v979
        %v981 = vmul.f32 %v873, 1.442695
        %v982 = vpow.pop %v981
        %v983 = vmul.f32 %v874, 1.442695
        %v984 = vpow.pop %v983
        %v985 = vmul.f32 %v875, 1.442695
        %v986 = vpow.pop %v985
        %v987 = vmul.f32 %v876, 1.442695
        %v988 = vpow.pop %v987
        %v989 = vmul.f32 %v877, 1.442695
        %v990 = vpow.pop %v989
        %v991 = vmul.f32 %v878, 1.442695
        %v992 = vpow.pop %v991
        %v993 = vmul.f32 %v879, 1.442695
        %v994 = vpow.pop %v993
        %v995 = vmul.f32 %v880, 1.442695
        %v996 = vpow.pop %v995
        %v997 = vmul.f32 %v881, 1.442695
        %v998 = vpow.pop %v997
        %v999 = vmul.f32 %v882, 1.442695
        %v1000 = vpow.pop %v999
        %v1001 = vmul.f32 %v883, 1.442695
        %v1002 = vpow.pop %v1001
        %v1003 = vmul.f32 %v884, 1.442695
        %v1004 = vpow.pop %v1003
        %v1005 = vmul.f32 %v885, 1.442695
        %v1006 = vpow.pop %v1005
        %v1007 = vmul.f32 %v886, 1.442695
        %v1008 = vpow.pop %v1007
        %v1009 = vmul.f32 %v887, 1.442695
        %v1010 = vpow.pop %v1009
        %v1011 = vmul.f32 %v888, 1.442695
        %v1012 = vpow.pop %v1011
        %v1013 = vmul.f32 %v889, 1.442695
        %v1014 = vpow.pop %v1013
        %v1015 = vmul.f32 %v890, 1.442695
        %v1016 = vpow.pop %v1015
        %v1017 = vmul.f32 %v891, 1.442695
        %v1018 = vpow.pop %v1017
        %v1019 = vmul.f32 %v892, 1.442695
        %v1020 = vpow.pop %v1019
        %v1021 = vld [vmem:[#allocation3] sm:$0x3]
        %v1022 = vmul.f32 %v817, %v1021
        %v1023 = vadd.f32 %v894, %v898
        %v1024 = vadd.f32 %v1023, %v902
        %v1025 = vadd.f32 %v1024, %v906
        %v1026 = vadd.f32 %v1025, %v910
        %v1027 = vadd.f32 %v1026, %v914
        %v1028 = vadd.f32 %v1027, %v918
        %v1029 = vadd.f32 %v1028, %v922
        %v1030 = vadd.f32 %v1029, %v926
        %v1031 = vadd.f32 %v1030, %v930
        %v1032 = vadd.f32 %v1031, %v934
        %v1033 = vadd.f32 %v1032, %v938
        %v1034 = vadd.f32 %v1033, %v942
        %v1035 = vadd.f32 %v1034, %v946
        %v1036 = vadd.f32 %v1035, %v950
        %v1037 = vadd.f32 %v1036, %v954
        %v1038 = vadd.f32 %v1037, %v958
        %v1039 = vadd.f32 %v1038, %v962
        %v1040 = vadd.f32 %v1039, %v966
        %v1041 = vadd.f32 %v1040, %v970
        %v1042 = vadd.f32 %v1041, %v974
        %v1043 = vadd.f32 %v1042, %v978
        %v1044 = vadd.f32 %v1043, %v982
        %v1045 = vadd.f32 %v1044, %v986
        %v1046 = vadd.f32 %v1045, %v990
        %v1047 = vadd.f32 %v1046, %v994
        %v1048 = vadd.f32 %v1047, %v998
        %v1049 = vadd.f32 %v1048, %v1002
        %v1050 = vadd.f32 %v1049, %v1006
        %v1051 = vadd.f32 %v1050, %v1010
        %v1052 = vadd.f32 %v1051, %v1014
        %v1053 = vadd.f32 %v1052, %v1018
        %v1054 = vrot.slane %v1053, 4
        %v1055 = vadd.f32 %v1053, %v1054
        %v1056 = vrot.slane %v1055, 2
        %v1057 = vadd.f32 %v1055, %v1056
        %v1058 = vrot.slane %v1057, 1
        %v1059 = vadd.f32 %v1057, %v1058
        %v1060 = vadd.f32 %v896, %v900
        %v1061 = vadd.f32 %v1060, %v904
        %v1062 = vadd.f32 %v1061, %v908
        %v1063 = vadd.f32 %v1062, %v912
        %v1064 = vadd.f32 %v1063, %v916
        %v1065 = vadd.f32 %v1064, %v920
        %v1066 = vadd.f32 %v1065, %v924
        %v1067 = vadd.f32 %v1066, %v928
        %v1068 = vadd.f32 %v1067, %v932
        %v1069 = vadd.f32 %v1068, %v936
        %v1070 = vadd.f32 %v1069, %v940
        %v1071 = vadd.f32 %v1070, %v944
        %v1072 = vadd.f32 %v1071, %v948
        %v1073 = vadd.f32 %v1072, %v952
        %v1074 = vadd.f32 %v1073, %v956
        %v1075 = vadd.f32 %v1074, %v960
        %v1076 = vadd.f32 %v1075, %v964
        %v1077 = vadd.f32 %v1076, %v968
        %v1078 = vadd.f32 %v1077, %v972
        %v1079 = vadd.f32 %v1078, %v976
        %v1080 = vadd.f32 %v1079, %v980
        %v1081 = vadd.f32 %v1080, %v984
        %v1082 = vadd.f32 %v1081, %v988
        %v1083 = vadd.f32 %v1082, %v992
        %v1084 = vadd.f32 %v1083, %v996
        %v1085 = vadd.f32 %v1084, %v1000
        %v1086 = vadd.f32 %v1085, %v1004
        %v1087 = vadd.f32 %v1086, %v1008
        %v1088 = vadd.f32 %v1087, %v1012
        %v1089 = vadd.f32 %v1088, %v1016
        %v1090 = vadd.f32 %v1089, %v1020
        %v1091 = vrot.slane %v1090, 4
        %v1092 = vadd.f32 %v1090, %v1091
        %v1093 = vrot.slane %v1092, 2
        %v1094 = vadd.f32 %v1092, %v1093
        %v1095 = vrot.slane %v1094, 1
        %v1096 = vadd.f32 %v1094, %v1095
        %v1099 = vcombine.low %v1059, %v1096
        %v1101 = vunpack.c.l.s4 1966171168
        %v1102 = vunpack.c.0.s8 %v1101
        %v1103 = vlaneseq
        %v1104 = vshrl.u32 %v1103, 7
        %v1105 = vsub.s32 %v1102, %v1104
        %v1106 = vrot.slane %v1099, %v1105
        %v1108 = vunpack.c.l.s4 1966171168
        %v1109 = vunpack.c.0.s8 %v1108
        %v1110 = vlaneseq
        %v1111 = vshrl.u32 %v1110, 7
        %v1112 = vsub.s32 %v1109, %v1111
        %v1113 = vrot.slane %v1106, %v1112
        %v1115 = vadd.f32 %v1022, %v1113
        %v1116 = vlaneseq
        %vm1117 = vcmp.ge.s32.totalorder %v1116, 0
        %vm1118 = vcmp.lt.s32.totalorder %v1116, 256
        %vm1119 = vmand %vm1117, %vm1118
        %1120 = vst.msk [vmem:[#allocation3] sm:$0x3] %vm1119, %v1115
        %v1121 = vpack.c.bf16 %v898, %v894
        %v1122 = vpack.c.bf16 %v900, %v896
        %v1123 = vpack.c.bf16 %v906, %v902
        %v1124 = vpack.c.bf16 %v908, %v904
        %v1125 = vpack.c.bf16 %v914, %v910
        %v1126 = vpack.c.bf16 %v916, %v912
        %v1127 = vpack.c.bf16 %v922, %v918
        %v1128 = vpack.c.bf16 %v924, %v920
        %v1129 = vpack.c.bf16 %v930, %v926
        %v1130 = vpack.c.bf16 %v932, %v928
        %v1131 = vpack.c.bf16 %v938, %v934
        %v1132 = vpack.c.bf16 %v940, %v936
        %v1133 = vpack.c.bf16 %v946, %v942
        %v1134 = vpack.c.bf16 %v948, %v944
        %v1135 = vpack.c.bf16 %v954, %v950
        %v1136 = vpack.c.bf16 %v956, %v952
        %v1137 = vpack.c.bf16 %v962, %v958
        %v1138 = vpack.c.bf16 %v964, %v960
        %v1139 = vpack.c.bf16 %v970, %v966
        %v1140 = vpack.c.bf16 %v972, %v968
        %v1141 = vpack.c.bf16 %v978, %v974
        %v1142 = vpack.c.bf16 %v980, %v976
        %v1143 = vpack.c.bf16 %v986, %v982
        %v1144 = vpack.c.bf16 %v988, %v984
        %v1145 = vpack.c.bf16 %v994, %v990
        %v1146 = vpack.c.bf16 %v996, %v992
        %v1147 = vpack.c.bf16 %v1002, %v998
        %v1148 = vpack.c.bf16 %v1004, %v1000
        %v1149 = vpack.c.bf16 %v1010, %v1006
        %v1150 = vpack.c.bf16 %v1012, %v1008
        %v1151 = vpack.c.bf16 %v1018, %v1014
        %v1152 = vpack.c.bf16 %v1020, %v1016
        %v1154 = vunpack.c.l.b16 %v427
        %v1155 = vunpack.c.h.b16 %v427
        %v1156 = vpack.c.b16 %v1154, %v1154
        %v1157 = vpack.c.b16 %v1155, %v1155
        %1160 = vmatprep.subr.bf16.mxu0 %v1136
        %1161 = vmatpush1.bf16.msra.mxu0 %v1135
        %1162 = vmatprep.subr.bf16.mxu0 %v1134
        %1163 = vmatpush1.bf16.msra.mxu0 %v1133
        %1164 = vmatprep.subr.bf16.mxu0 %v1132
        %1165 = vmatpush1.bf16.msra.mxu0 %v1131
        %1166 = vmatprep.subr.bf16.mxu0 %v1130
        %1167 = vmatpush1.bf16.msra.mxu0 %v1129
        %1168 = vmatprep.subr.bf16.mxu0 %v1128
        %1169 = vmatpush1.bf16.msra.mxu0 %v1127
        %1170 = vmatprep.subr.bf16.mxu0 %v1126
        %1171 = vmatpush1.bf16.msra.mxu0 %v1125
        %1172 = vmatprep.subr.bf16.mxu0 %v1124
        %1173 = vmatpush1.bf16.msra.mxu0 %v1123
        %1174 = vmatprep.subr.bf16.mxu0 %v1122
        %1175 = vmatpush1.bf16.msra.mxu0 %v1121
        %1176 = vmatprep.subr.bf16.mxu0 %v1152
        %1177 = vmatpush2.bf16.msra.mxu0 %v1151
        %1178 = vmatprep.subr.bf16.mxu0 %v1150
        %1179 = vmatpush2.bf16.msra.mxu0 %v1149
        %1180 = vmatprep.subr.bf16.mxu0 %v1148
        %1181 = vmatpush2.bf16.msra.mxu0 %v1147
        %1182 = vmatprep.subr.bf16.mxu0 %v1146
        %1183 = vmatpush2.bf16.msra.mxu0 %v1145
        %1184 = vmatprep.subr.bf16.mxu0 %v1144
        %1185 = vmatpush2.bf16.msra.mxu0 %v1143
        %1186 = vmatprep.subr.bf16.mxu0 %v1142
        %1187 = vmatpush2.bf16.msra.mxu0 %v1141
        %1188 = vmatprep.subr.bf16.mxu0 %v1140
        %1189 = vmatpush2.bf16.msra.mxu0 %v1139
        %1190 = vmatprep.subr.bf16.mxu0 %v1138
        %1191 = vmatpush2.bf16.msra.mxu0 %v1137
        %1192 = vmatprep.mubr.bf16.mxu0 %v1157
        %1193 = vmatmul.mubr.bf16.gmra.mxu0 %v1156
        %v1194 = vpop.f32.mrf.mxu0
        %v1195 = vadd.f32 0.0, %v1194
        %v1196 = vpop.f32.mrf.mxu0
        %v1197 = vadd.f32 0.0, %v1196
        %v1198 = vpop.f32.mrf.mxu0
        %v1199 = vpop.f32.mrf.mxu0
        %1200 = vdwg.mxu0
        %v1201 = vld [vmem:[#allocation4] sm:$0xff]
        %v1202 = vld [vmem:[#allocation4 + $0x8] sm:$0xff]
        %v1204 = vlaneseq
        %v1205 = vshrl.u32 %v1204, 7
        %v1206 = vsub.s32 0, %v1205
        %v1207 = vrot.slane %v817, %v1206
        %v1208 = vlaneseq
        %v1209 = vshrl.u32 %v1208, 7
        %v1210 = vsub.s32 1, %v1209
        %v1211 = vrot.slane %v817, %v1210
        %v1214 = vmul.f32 %v1207, %v1201
        %v1215 = vmul.f32 %v1211, %v1202
        %v1216 = vadd.f32 %v1214, %v1195
        %v1217 = vadd.f32 %v1215, %v1197
        %1218 = vst [vmem:[#allocation4] sm:$0xff] %v1216
        %1219 = vst [vmem:[#allocation4 + $0x8] sm:$0xff] %v1217
        %1220 = vst.msk [vmem:[#allocation2] sm:$0x3] %vm1119, %v814
        // Predicated region
        $region53: #{danet_forward.3} parent=43 // pred_check
          %p1221 = pneg %p406
        $region54: #{danet_forward.3} parent=43 // pred_check_branch
          %1223 = sbr.rel (%p1221) target = $region56
        $region55: #{danet_forward.3} parent=43 // pred_region
          %s1224 = sld [smem:[#allocation5]]
          %s1225 = sld [smem:[#allocation5 + $0x1]]
          %v1226 = vld [vmem:[%s373] sm:$0xff]
          %v1227 = vld [vmem:[#allocation4] sm:$0xff]
          %v1228 = vld [vmem:[#allocation4 + $0x8] sm:$0xff]
          %v1229 = vld [vmem:[#allocation3] sm:$0x3]
          %v1230 = vrcp.pop %v1229
          %v1232 = vlaneseq
          %v1233 = vshrl.u32 %v1232, 7
          %v1234 = vsub.s32 0, %v1233
          %v1235 = vrot.slane %v1230, %v1234
          %v1236 = vlaneseq
          %v1237 = vshrl.u32 %v1236, 7
          %v1238 = vsub.s32 1, %v1237
          %v1239 = vrot.slane %v1230, %v1238
          %v1242 = vmul.f32 %v1227, %v1235
          %v1243 = vmul.f32 %v1228, %v1239
          %v1244 = vld [vmem:[%s364] sm:$0xf]
          %v1246 = vunpack.c.l.b16 %v1226
          %v1247 = vunpack.c.h.b16 %v1226
          %v1248 = vpack.c.b16 %v1246, %v1246
          %v1249 = vpack.c.b16 %v1247, %v1247
          %v1251 = vsel %vm472, %v1244, 0
          %v1254 = vsel %vm521, %v1248, 0
          %v1257 = vsel %vm521, %v1249, 0
          %1259 = vmatprep.subr.bf16.mxu0 0
          %1260 = vmatpush1.bf16.msra.mxu0 0
          %1261 = vmatprep.subr.bf16.mxu0 0
          %1262 = vmatpush1.bf16.msra.mxu0 0
          %1263 = vmatprep.subr.bf16.mxu0 0
          %1264 = vmatpush1.bf16.msra.mxu0 0
          %1265 = vmatprep.subr.bf16.mxu0 0
          %1266 = vmatpush1.bf16.msra.mxu0 0
          %1267 = vmatprep.subr.bf16.mxu0 0
          %1268 = vmatpush1.bf16.msra.mxu0 0
          %1269 = vmatprep.subr.bf16.mxu0 0
          %1270 = vmatpush1.bf16.msra.mxu0 0
          %1271 = vmatprep.subr.bf16.mxu0 0
          %1272 = vmatpush1.bf16.msra.mxu0 0
          %1273 = vmatprep.subr.bf16.mxu0 %v1257
          %1274 = vmatpush1.bf16.msra.mxu0 %v1254
          %1275 = vmatprep.subr.bf16.mxu0 0
          %1276 = vmatpush2.bf16.msra.mxu0 0
          %1277 = vmatprep.subr.bf16.mxu0 0
          %1278 = vmatpush2.bf16.msra.mxu0 0
          %1279 = vmatprep.subr.bf16.mxu0 0
          %1280 = vmatpush2.bf16.msra.mxu0 0
          %1281 = vmatprep.subr.bf16.mxu0 0
          %1282 = vmatpush2.bf16.msra.mxu0 0
          %1283 = vmatprep.subr.bf16.mxu0 0
          %1284 = vmatpush2.bf16.msra.mxu0 0
          %1285 = vmatprep.subr.bf16.mxu0 0
          %1286 = vmatpush2.bf16.msra.mxu0 0
          %1287 = vmatprep.subr.bf16.mxu0 0
          %1288 = vmatpush2.bf16.msra.mxu0 0
          %1289 = vmatprep.subr.bf16.mxu0 0
          %1290 = vmatpush2.bf16.msra.mxu0 0
          %1291 = vmatprep.mubr.bf16.mxu0 0
          %1292 = vmatmul.mubr.bf16.gmra.mxu0 %v1251
          %v1293 = vpop.f32.mrf.mxu0
          %v1294 = vadd.f32 0.0, %v1293
          %v1295 = vpop.f32.mrf.mxu0
          %v1296 = vadd.f32 0.0, %v1295
          %v1297 = vpop.f32.mrf.mxu0
          %v1298 = vpop.f32.mrf.mxu0
          %1299 = vdwg.mxu0
          %v1300 = vunpack.c.l.bf16 %v1226
          %v1301 = vunpack.c.h.bf16 %v1226
          %v1302 = vmul.f32 %v1300, 2.0
          %v1303 = vmul.f32 %v1301, 2.0
          %v1304 = vstv %s1224
          %v1305 = vmul.f32 %v1304, %v1294
          %v1306 = vmul.f32 %v1304, %v1296
          %v1307 = vadd.f32 %v1302, %v1305
          %v1308 = vadd.f32 %v1303, %v1306
          %v1309 = vstv %s1225
          %v1310 = vmul.f32 %v1309, %v1242
          %v1311 = vmul.f32 %v1309, %v1243
          %v1312 = vadd.f32 %v1307, %v1310
          %v1313 = vadd.f32 %v1308, %v1311
          %1314 = vst [vmem:[%s403] sm:$0xff] %v1312
          %1315 = vst [vmem:[%s403 + $0x8] sm:$0xff] %v1313
        $region56: #{danet_forward.3} parent=43 // pred_fallthru
          _
        %s1316 = smul.u32 2, %s24
        %p1317 = scmp.lt.s32.totalorder %s23, 1
        %s1318 = scalar_select %p1317, %s23, 1
        %p1319 = scmp.lt.s32.totalorder %s1316, 1
        %s1320 = scalar_select %p1319, %s1316, 1
        %s1321 = smul.addr %s1318, 2
        %s1322 = sadd.s32 %s1320, %s1321
        %s1323 = smul.addr %s1322, 8
        %s1324 = scalar_lea.vmem %s6, %s1323
        // Predicated region
        $region57: #{danet_forward.3} parent=43 // pred_check
          %p1325 = pneg %p212
        $region58: #{danet_forward.3} parent=43 // pred_check_branch
          %1327 = sbr.rel (%p1325) target = $region60
        $region59: #{danet_forward.3} parent=43 // pred_region
          %s1328 = smul.u32 2, %s24
        $region60: #{danet_forward.3} parent=43 // pred_fallthru
          _
      $region44: #{danet_forward.3} parent=5 // pred_fallthru
        _
      %p1329 = scmp.le.s32.totalorder 2, %s13
      // Predicated region
      $region61: #{danet_forward.3} parent=5 // pred_check
        %p1330 = pneg %p1329
      $region62: #{danet_forward.3} parent=5 // pred_check_branch
        %1332 = sbr.rel (%p1330) target = $region64
      $region63: #{danet_forward.3} parent=5 // pred_region
        %s1333 = ssub.s32 %s13, 2
        // Predicated region
        $region65: #{danet_forward.3} parent=63 // pred_check
          %p1334 = pneg %p218
        $region66: #{danet_forward.3} parent=63 // pred_check_branch
          %1336 = sbr.rel (%p1334) target = $region68
        $region67: #{danet_forward.3} parent=63 // pred_region
          %s1337 = smul.u32 2, %s27
          %p1338 = scmp.lt.s32.totalorder %s26, 1
          %s1339 = scalar_select %p1338, %s26, 1
          %p1340 = scmp.lt.s32.totalorder %s1337, 1
          %s1341 = scalar_select %p1340, %s1337, 1
          %s1342 = smul.addr %s1339, 2
          %s1343 = sadd.s32 %s1341, %s1342
          %s1344 = smul.addr %s1343, 8
          %s1345 = scalar_lea.vmem %s6, %s1344
        $region68: #{danet_forward.3} parent=63 // pred_fallthru
          _
      $region64: #{danet_forward.3} parent=5 // pred_fallthru
        _
    $region6: #{danet_forward.3} parent=1 // loop_footer
      %s17 = sadd.s32 1, %s13
    $region7: #{danet_forward.3} parent=1 // loop_footer_branch
      %12 = sbr.rel target = $region3
    $region8: #{danet_forward.3} parent=1 // loop_exit
      _
    %1346 = vsyncpa [#allocation6], 1
    %s1347 = scalar_lea.sflag [#allocation6], 1
    %1348 = vsyncpa %s1347, 1

</llo_original>
